<compile_context>
chip_gen: v7x
topology: tpu7x:2x2x1
jax: 0.10.0
libtpu: 0.0.40
codegen_flags: <defaults>
</compile_context>

<pallas_src>
import math

import jax
import jax.numpy as jnp
from jax.experimental import pallas as pl
from jax.experimental.pallas import tpu as pltpu

MLPMAT_INNER_SIZE = 64
MLP_SCALE = 4


def _gelu_tanh(x):
    # GELU with tanh approximation (matches nn.GELU(approximate='tanh')).
    c = 0.7978845608028654  # sqrt(2/pi)
    return 0.5 * x * (1.0 + jnp.tanh(c * (x + 0.044715 * x * x * x)))


def _cdiv(a, b):
    return (a + b - 1) // b


def _round_up(v, m):
    return ((v + m - 1) // m) * m


def _tpu_info():
    """(is_v7x, num_tensorcores, vmem_limit_cap_bytes) of the local device."""
    kind = ''
    try:
        kind = (jax.devices()[0].device_kind or '').lower()
    except Exception:
        pass
    is_v7 = '7' in kind
    num_tc = 2 if is_v7 else 1
    # v7x: 64 MiB physical VMEM per TC -> leave headroom.  v5e/v6e: 128 MiB.
    vmem_cap = (56 if is_v7 else 100) * 1024 * 1024
    return is_v7, num_tc, vmem_cap


def _const_spec(shape):
    """Constant-index (weight-resident) BlockSpec, single-buffered."""
    idx = lambda i, j: (0, 0)
    try:
        return pl.BlockSpec(shape, idx, pipeline_mode=pl.Buffered(1))
    except TypeError:  # older jax without pipeline_mode: default double-buffer
        return pl.BlockSpec(shape, idx)


def _pick_f_tile(F, max_tf):
    for cand in (2048, 1024, 512, 256, 128):
        if cand <= max_tf and F % cand == 0:
            return cand
    return F


def _vmem_estimate_bytes(tm, C, Cp, H, tF):
    bf16, f32 = 2, 4
    est = 2 * tm * C * f32                      # x row tile (double-buffered)
    est += C * H * bf16 + H * f32               # W1 + b1 (single-buffered)
    est += H * Cp * bf16 + Cp * f32             # W2 bias cols + b2 bias cols
    est += 2 * (H * tF * bf16 + tF * f32)       # W2/b2 fparams tiles (dbl-buffered)
    est += 2 * tm * Cp * f32                    # bias output
    est += 2 * tm * tF * f32                    # fparams output tile
    est += tm * H * bf16                        # h scratch
    est += tm * (H + tF + Cp) * f32             # compiler-managed f32 temporaries
    return est


def _ben_kernel(x_ref, w1_ref, b1_ref, w2b_ref, b2b_ref, w2f_ref, b2f_ref,
                bias_ref, fp_ref, h_scratch):
    j = pl.program_id(1)

    # c_fc + GELU(tanh) once per row tile; cached in bf16 for all F tiles.
    @pl.when(j == 0)
    def _():
        h = jnp.dot(x_ref[...].astype(w1_ref.dtype), w1_ref[...],
                    preferred_element_type=jnp.float32)
        h = _gelu_tanh(h + b1_ref[...])
        h_scratch[...] = h.astype(h_scratch.dtype)

    hc = h_scratch[...]

    # fparams column tile of c_proj (bf16 MXU matmul, f32 accumulation).
    yf = jnp.dot(hc, w2f_ref[...], preferred_element_type=jnp.float32)
    fp_ref[...] = (yf + b2f_ref[...]).astype(fp_ref.dtype)

    # bias columns of c_proj (lane-padded to a multiple of 128).  The bias
    # output block is resident across the F axis; write it once on the last
    # F step of each row tile.
    @pl.when(j == pl.num_programs(1) - 1)
    def _():
        yb = jnp.dot(hc, w2b_ref[...], preferred_element_type=jnp.float32)
        bias_ref[...] = (yb + b2b_ref[...]).astype(bias_ref.dtype)


def ben_compiler2_forward(x, w1, b1, w2, b2, *, compute_dtype=jnp.bfloat16,
                          block_m=256):
    """BenCompiler2 forward pass.

    x : (..., C)      float32 activations
    w1: (C, H)        c_fc weight stored as (in, out)  == PyTorch weight.T
    b1: (H,)          c_fc bias
    w2: (H, C + F)    c_proj weight stored as (in, out) == PyTorch weight.T
    b2: (C + F,)      c_proj bias, F = MLPMAT_INNER_SIZE**2
    Returns {'bias': (..., C), 'fparams': (..., F)} in float32.
    """
    lead = x.shape[:-1]
    C = x.shape[-1]
    H = w1.shape[1]
    F = w2.shape[1] - C
    assert F == MLPMAT_INNER_SIZE * MLPMAT_INNER_SIZE, F

    is_v7, num_tc, vmem_cap = _tpu_info()

    M = int(math.prod(lead)) if lead else 1
    x2 = x.reshape(M, C)            # stays f32; cast to bf16 inside the kernel

    # Weights pre-cast to the MXU compute dtype; c_proj pre-split into the
    # 'bias' / 'fparams' column groups.  Biases stay f32 (added post-accum).
    Cp = _round_up(C, 128)          # lane-dense bias columns (pad narrow C)
    w1c = w1.astype(compute_dtype)
    w2b = w2[:, :C].astype(compute_dtype)
    w2f = w2[:, C:].astype(compute_dtype)
    b1r = b1.reshape(1, H).astype(jnp.float32)
    b2b = b2[:C].reshape(1, C).astype(jnp.float32)
    b2f = b2[C:].reshape(1, F).astype(jnp.float32)
    if Cp != C:
        w2b = jnp.pad(w2b, ((0, 0), (0, Cp - C)))
        b2b = jnp.pad(b2b, ((0, 0), (0, Cp - C)))

    # fparams column tiling (innermost 'arbitrary' grid axis) caps W2f VMEM
    # residency; smaller tiles on v7x (64 MiB VMEM per TensorCore).
    tF = _pick_f_tile(F, 1024 if is_v7 else 2048)
    n_f = F // tF

    # Row tiling: multiple of 16, zero-padded to tile evenly.  Only force a
    # >=2-way row split on chips with 2 TensorCores (v7x); on v5e/v6e the grid
    # is a sequential loop, so splitting small M only adds per-step overhead.
    tm = max(16, min(_round_up(block_m, 16), _round_up(M, 16)))
    if num_tc >= 2 and _cdiv(M, tm) < 2 and M >= 32:
        tm = max(16, _round_up(_cdiv(M, 2), 16))
    n_rows = _cdiv(M, tm)
    Mp = n_rows * tm
    if Mp != M:
        x2 = jnp.pad(x2, ((0, Mp - M), (0, 0)))

    vmem_limit = min(vmem_cap,
                     max(32 * 1024 * 1024,
                         int(1.4 * _vmem_estimate_bytes(tm, C, Cp, H, tF))))

    cost = pl.CostEstimate(
        flops=2 * Mp * C * H + 2 * Mp * H * (Cp + F),
        transcendentals=Mp * H,
        bytes_accessed=(Mp * C * 4 + C * H * 2 + H * 4
                        + H * (Cp + F) * 2 + (Cp + F) * 4
                        + Mp * (Cp + F) * 4),
    )

    bias_out, fp_out = pl.pallas_call(
        _ben_kernel,
        out_shape=(jax.ShapeDtypeStruct((Mp, Cp), jnp.float32),
                   jax.ShapeDtypeStruct((Mp, F), jnp.float32)),
        grid_spec=pltpu.PrefetchScalarGridSpec(
            num_scalar_prefetch=0,
            grid=(n_rows, n_f),
            in_specs=[
                pl.BlockSpec((tm, C), lambda i, j: (i, 0)),   # x row tile
                _const_spec((C, H)),                          # W1 (resident, 1 buf)
                _const_spec((1, H)),                          # b1
                _const_spec((H, Cp)),                         # W2[:, :C] (padded)
                _const_spec((1, Cp)),                         # b2[:C]
                pl.BlockSpec((H, tF), lambda i, j: (0, j)),   # W2 fparams col tile
                pl.BlockSpec((1, tF), lambda i, j: (0, j)),   # b2 fparams col tile
            ],
            out_specs=(
                pl.BlockSpec((tm, Cp), lambda i, j: (i, 0)),  # bias (resident in j)
                pl.BlockSpec((tm, tF), lambda i, j: (i, j)),  # fparams
            ),
            scratch_shapes=[pltpu.VMEM((tm, H), compute_dtype)],  # cached gelu(c_fc)
        ),
        compiler_params=pltpu.CompilerParams(
            dimension_semantics=("parallel", "arbitrary"),
            vmem_limit_bytes=vmem_limit,
        ),
        cost_estimate=cost,
    )(x2, w1c, b1r, w2b, b2b, w2f, b2f)

    bias_out = bias_out[:M, :C].reshape(*lead, C)
    fp_out = fp_out[:M].reshape(*lead, F)
    return {'bias': bias_out, 'fparams': fp_out}


def reference_forward(x, w1, b1, w2, b2, compute_dtype=jnp.bfloat16):
    """Pure-JAX reference mirroring the kernel's dtype handling."""
    C = x.shape[-1]
    h = jnp.dot(x.astype(compute_dtype), w1.astype(compute_dtype),
                preferred_element_type=jnp.float32) + b1
    h = _gelu_tanh(h)
    y = jnp.dot(h.astype(compute_dtype), w2.astype(compute_dtype),
                preferred_element_type=jnp.float32) + b2
    return {'bias': y[..., :C], 'fparams': y[..., C:]}


if __name__ == "__main__":
    # Small, module-consistent shapes: batch=2, seq=8, n_embd=32.
    B, T, C = 2, 8, 32
    H = MLP_SCALE * C                            # 128
    F = MLPMAT_INNER_SIZE * MLPMAT_INNER_SIZE    # 4096

    key = jax.random.PRNGKey(0)
    kx, k1, k2, k3, k4 = jax.random.split(key, 5)

    x = jax.random.normal(kx, (B, T, C), dtype=jnp.float32)
    # "Linear" params stored as (in, out) (== PyTorch nn.Linear weight.T).
    w1 = jax.random.normal(k1, (C, H), dtype=jnp.float32) * 0.02
    b1 = jax.random.normal(k2, (H,), dtype=jnp.float32) * 0.02
    w2 = jax.random.normal(k3, (H, C + F), dtype=jnp.float32) * 0.02
    b2 = jax.random.normal(k4, (C + F,), dtype=jnp.float32) * 0.02

    out = ben_compiler2_forward(x, w1, b1, w2, b2)
    out = jax.block_until_ready(out)

    ref = reference_forward(x, w1, b1, w2, b2)
    assert out['bias'].shape == (B, T, C), out['bias'].shape
    assert out['fparams'].shape == (B, T, F), out['fparams'].shape
    err_b = float(jnp.max(jnp.abs(out['bias'] - ref['bias'])))
    err_f = float(jnp.max(jnp.abs(out['fparams'] - ref['fparams'])))
    assert err_b < 5e-4 and err_f < 5e-4, (err_b, err_f)

    print("KERNEL_OK")
</pallas_src>

<mosaic_0001>
module attributes {stable_mosaic.version = 11 : i64} {
  func.func @_ben_kernel(%arg0: i32, %arg1: i32, %arg2: memref<16x32xf32, #tpu.memory_space<vmem>>, %arg3: memref<32x128xbf16, #tpu.memory_space<vmem>>, %arg4: memref<1x128xf32, #tpu.memory_space<vmem>>, %arg5: memref<128x128xbf16, #tpu.memory_space<vmem>>, %arg6: memref<1x128xf32, #tpu.memory_space<vmem>>, %arg7: memref<128x2048xbf16, #tpu.memory_space<vmem>>, %arg8: memref<1x2048xf32, #tpu.memory_space<vmem>>, %arg9: memref<16x128xf32, #tpu.memory_space<vmem>>, %arg10: memref<16x2048xf32, #tpu.memory_space<vmem>>, %arg11: memref<16x128xbf16, #tpu.memory_space<vmem>>) attributes {dimension_semantics = [#tpu.dimension_semantics<parallel>, #tpu.dimension_semantics<arbitrary>], iteration_bounds = array<i64: 1, 2>, scalar_prefetch = 0 : i64, scratch_operands = 1 : i64, tpu.core_type = #tpu.core_type<tc>, window_params = [{transform_indices = @transform_0, window_bounds = array<i64: 16, 32>}, {pipeline_mode = #tpu.pipeline_mode<synchronous>, transform_indices = @transform_1, window_bounds = array<i64: 32, 128>}, {pipeline_mode = #tpu.pipeline_mode<synchronous>, transform_indices = @transform_2, window_bounds = array<i64: 1, 128>}, {pipeline_mode = #tpu.pipeline_mode<synchronous>, transform_indices = @transform_3, window_bounds = array<i64: 128, 128>}, {pipeline_mode = #tpu.pipeline_mode<synchronous>, transform_indices = @transform_4, window_bounds = array<i64: 1, 128>}, {transform_indices = @transform_5, window_bounds = array<i64: 128, 2048>}, {transform_indices = @transform_6, window_bounds = array<i64: 1, 2048>}, {transform_indices = @transform_7, window_bounds = array<i64: 16, 128>}, {transform_indices = @transform_8, window_bounds = array<i64: 16, 2048>}]} {
    %c0_i32 = arith.constant 0 : i32
    %0 = arith.cmpi eq, %arg1, %c0_i32 : i32
    %1 = arith.extui %0 : i1 to i32
    %c0_i32_0 = arith.constant 0 : i32
    %2 = arith.cmpi ne, %1, %c0_i32_0 : i32
    scf.if %2 {
      %c0_9 = arith.constant 0 : index
      %c0_10 = arith.constant 0 : index
      %13 = vector.load %arg2[%c0_9, %c0_10] : memref<16x32xf32, #tpu.memory_space<vmem>>, vector<16x32xf32>
      %14 = arith.truncf %13 : vector<16x32xf32> to vector<16x32xbf16>
      %c0_11 = arith.constant 0 : index
      %c0_12 = arith.constant 0 : index
      %15 = vector.load %arg3[%c0_11, %c0_12] : memref<32x128xbf16, #tpu.memory_space<vmem>>, vector<32x128xbf16>
      %cst_13 = arith.constant dense<0.000000e+00> : vector<16x128xf32>
      %16 = tpu.matmul %14, %15, %cst_13 {dimension_numbers = #tpu.dot_dimension_numbers<[1], [0], [0], [1], [0, 0, 1, 1], [], []>} : vector<16x32xbf16>, vector<32x128xbf16>, vector<16x128xf32> -> vector<16x128xf32>
      %c0_14 = arith.constant 0 : index
      %c0_15 = arith.constant 0 : index
      %17 = vector.load %arg4[%c0_14, %c0_15] : memref<1x128xf32, #tpu.memory_space<vmem>>, vector<1x128xf32>
      %18 = vector.broadcast %17 : vector<1x128xf32> to vector<16x128xf32>
      %19 = arith.addf %16, %18 : vector<16x128xf32>
      %cst_16 = arith.constant 5.000000e-01 : f32
      %20 = vector.broadcast %cst_16 : f32 to vector<16x128xf32>
      %21 = arith.mulf %20, %19 : vector<16x128xf32>
      %cst_17 = arith.constant 4.471500e-02 : f32
      %22 = vector.broadcast %cst_17 : f32 to vector<16x128xf32>
      %23 = arith.mulf %22, %19 : vector<16x128xf32>
      %24 = arith.mulf %23, %19 : vector<16x128xf32>
      %25 = arith.mulf %24, %19 : vector<16x128xf32>
      %26 = arith.addf %19, %25 : vector<16x128xf32>
      %cst_18 = arith.constant 0.797884583 : f32
      %27 = vector.broadcast %cst_18 : f32 to vector<16x128xf32>
      %28 = arith.mulf %27, %26 : vector<16x128xf32>
      %29 = math.tanh %28 : vector<16x128xf32>
      %cst_19 = arith.constant 1.000000e+00 : f32
      %30 = vector.broadcast %cst_19 : f32 to vector<16x128xf32>
      %31 = arith.addf %30, %29 : vector<16x128xf32>
      %32 = arith.mulf %21, %31 : vector<16x128xf32>
      %33 = arith.truncf %32 : vector<16x128xf32> to vector<16x128xbf16>
      %c0_20 = arith.constant 0 : index
      %c0_21 = arith.constant 0 : index
      %34 = vector.load %arg11[%c0_20, %c0_21] : memref<16x128xbf16, #tpu.memory_space<vmem>>, vector<16x128xbf16>
      tpu.vector_store %arg11[%c0_20, %c0_21], %33 {strides = array<i32>} : memref<16x128xbf16, #tpu.memory_space<vmem>>, vector<16x128xbf16>,
    } else {
    }
    %c0 = arith.constant 0 : index
    %c0_1 = arith.constant 0 : index
    %3 = vector.load %arg11[%c0, %c0_1] : memref<16x128xbf16, #tpu.memory_space<vmem>>, vector<16x128xbf16>
    %c0_2 = arith.constant 0 : index
    %c0_3 = arith.constant 0 : index
    %4 = vector.load %arg7[%c0_2, %c0_3] : memref<128x2048xbf16, #tpu.memory_space<vmem>>, vector<128x2048xbf16>
    %cst = arith.constant dense<0.000000e+00> : vector<16x2048xf32>
    %5 = tpu.matmul %3, %4, %cst {dimension_numbers = #tpu.dot_dimension_numbers<[1], [0], [0], [1], [0, 0, 1, 1], [], []>} : vector<16x128xbf16>, vector<128x2048xbf16>, vector<16x2048xf32> -> vector<16x2048xf32>
    %c0_4 = arith.constant 0 : index
    %c0_5 = arith.constant 0 : index
    %6 = vector.load %arg8[%c0_4, %c0_5] : memref<1x2048xf32, #tpu.memory_space<vmem>>, vector<1x2048xf32>
    %7 = vector.broadcast %6 : vector<1x2048xf32> to vector<16x2048xf32>
    %8 = arith.addf %5, %7 : vector<16x2048xf32>
    %c0_6 = arith.constant 0 : index
    %c0_7 = arith.constant 0 : index
    %9 = vector.load %arg10[%c0_6, %c0_7] : memref<16x2048xf32, #tpu.memory_space<vmem>>, vector<16x2048xf32>
    tpu.vector_store %arg10[%c0_6, %c0_7], %8 {strides = array<i32>} : memref<16x2048xf32, #tpu.memory_space<vmem>>, vector<16x2048xf32>,
    %c1_i32 = arith.constant 1 : i32
    %10 = arith.cmpi eq, %arg1, %c1_i32 : i32
    %11 = arith.extui %10 : i1 to i32
    %c0_i32_8 = arith.constant 0 : i32
    %12 = arith.cmpi ne, %11, %c0_i32_8 : i32
    scf.if %12 {
      %c0_9 = arith.constant 0 : index
      %c0_10 = arith.constant 0 : index
      %13 = vector.load %arg5[%c0_9, %c0_10] : memref<128x128xbf16, #tpu.memory_space<vmem>>, vector<128x128xbf16>
      %cst_11 = arith.constant dense<0.000000e+00> : vector<16x128xf32>
      %14 = tpu.matmul %3, %13, %cst_11 {dimension_numbers = #tpu.dot_dimension_numbers<[1], [0], [0], [1], [0, 0, 1, 1], [], []>} : vector<16x128xbf16>, vector<128x128xbf16>, vector<16x128xf32> -> vector<16x128xf32>
      %c0_12 = arith.constant 0 : index
      %c0_13 = arith.constant 0 : index
      %15 = vector.load %arg6[%c0_12, %c0_13] : memref<1x128xf32, #tpu.memory_space<vmem>>, vector<1x128xf32>
      %16 = vector.broadcast %15 : vector<1x128xf32> to vector<16x128xf32>
      %17 = arith.addf %14, %16 : vector<16x128xf32>
      %c0_14 = arith.constant 0 : index
      %c0_15 = arith.constant 0 : index
      %18 = vector.load %arg9[%c0_14, %c0_15] : memref<16x128xf32, #tpu.memory_space<vmem>>, vector<16x128xf32>
      tpu.vector_store %arg9[%c0_14, %c0_15], %17 {strides = array<i32>} : memref<16x128xf32, #tpu.memory_space<vmem>>, vector<16x128xf32>,
    } else {
    }
    return
  }
  func.func @transform_0(%arg0: i32, %arg1: i32) -> (i32, i32) {
    %c0_i32 = arith.constant 0 : i32
    %c0_i32_0 = arith.constant 0 : i32
    return %arg0, %c0_i32 : i32, i32
  }
  func.func @transform_1(%arg0: i32, %arg1: i32) -> (i32, i32) {
    %c0_i32 = arith.constant 0 : i32
    %c0_i32_0 = arith.constant 0 : i32
    %c0_i32_1 = arith.constant 0 : i32
    return %c0_i32, %c0_i32_0 : i32, i32
  }
  func.func @transform_2(%arg0: i32, %arg1: i32) -> (i32, i32) {
    %c0_i32 = arith.constant 0 : i32
    %c0_i32_0 = arith.constant 0 : i32
    %c0_i32_1 = arith.constant 0 : i32
    return %c0_i32, %c0_i32_0 : i32, i32
  }
  func.func @transform_3(%arg0: i32, %arg1: i32) -> (i32, i32) {
    %c0_i32 = arith.constant 0 : i32
    %c0_i32_0 = arith.constant 0 : i32
    %c0_i32_1 = arith.constant 0 : i32
    return %c0_i32, %c0_i32_0 : i32, i32
  }
  func.func @transform_4(%arg0: i32, %arg1: i32) -> (i32, i32) {
    %c0_i32 = arith.constant 0 : i32
    %c0_i32_0 = arith.constant 0 : i32
    %c0_i32_1 = arith.constant 0 : i32
    return %c0_i32, %c0_i32_0 : i32, i32
  }
  func.func @transform_5(%arg0: i32, %arg1: i32) -> (i32, i32) {
    %c0_i32 = arith.constant 0 : i32
    %c0_i32_0 = arith.constant 0 : i32
    return %c0_i32, %arg1 : i32, i32
  }
  func.func @transform_6(%arg0: i32, %arg1: i32) -> (i32, i32) {
    %c0_i32 = arith.constant 0 : i32
    %c0_i32_0 = arith.constant 0 : i32
    return %c0_i32, %arg1 : i32, i32
  }
  func.func @transform_7(%arg0: i32, %arg1: i32) -> (i32, i32) {
    %c0_i32 = arith.constant 0 : i32
    %c0_i32_0 = arith.constant 0 : i32
    return %arg0, %c0_i32 : i32, i32
  }
  func.func @transform_8(%arg0: i32, %arg1: i32) -> (i32, i32) {
    %c0_i32 = arith.constant 0 : i32
    return %arg0, %arg1 : i32, i32
  }
}

</mosaic_0001>

<llo_original>
// kernel: tpu_custom_call.1
$region0: #{tpu_custom_call.1}
  #allocation0 [shape = 'u32[]', space=smem, size = 0x4, offset = 0x4, fixed_abs, tag = 'smem constant byte address 0x4 - core index']
  #allocation1 [shape = 'u32[144,128]{1,0:T(1,128)}', space=vmem, size = 0x12000, scoped, tag = 'internal scratch']
  #allocation2 [shape = 'bf16[16,128]{1,0:T(16,128)(2,1)}', space=vmem, size = 0x1000, scoped, tag = 'scratch operand']
  %s0 = inlined_call_operand.hbm [shape: f32[16,32], index: 0, kind: input, shape index: {}]
  %s1 = inlined_call_operand.hbm [shape: bf16[32,128], index: 1, kind: input, shape index: {}]
  %s2 = inlined_call_operand.vmem [shape: f32[1,128], index: 2, kind: input, shape index: {}]
  %s3 = inlined_call_operand.hbm [shape: bf16[128,128], index: 3, kind: input, shape index: {}]
  %s4 = inlined_call_operand.vmem [shape: f32[1,128], index: 4, kind: input, shape index: {}]
  %s5 = inlined_call_operand.hbm [shape: bf16[128,4096], index: 5, kind: input, shape index: {}]
  %s6 = inlined_call_operand.hbm [shape: f32[1,4096], index: 6, kind: input, shape index: {}]
  %s7 = inlined_call_operand.hbm [shape: f32[16,128], index: 7, kind: output, shape index: {0}]
  %s8 = inlined_call_operand.hbm [shape: f32[16,4096], index: 8, kind: output, shape index: {1}]
  %9 = xla_tuple %s7, %s8
  %s10 = sld [smem:[#allocation0]]
  $region97: #{tpu_custom_call.1} parent=0
    _
  %s12 = ssub.s32 1, %s10
  %s13 = scalar_select 0, %s12, %s10
  $region1: #{tpu_custom_call.1} parent=0
    #allocation3 [shape = 'u8[8192]{0}', space=vmem, size = 0x2000, scoped, tag = 'input window, operand 0, single buffered']
    #allocation4 [shape = 's32[2]{0}', space=sflag, size = 0x8, scoped, tag = 'scoped memory for tpu_custom_call.1']
    #allocation5 [shape = 's32[2]{0}', space=sflag, size = 0x8, scoped, tag = 'scoped memory for tpu_custom_call.1']
    #allocation6 [shape = 'u8[8192]{0}', space=vmem, size = 0x2000, scoped, tag = 'input window, operand 1, single buffered']
    #allocation7 [shape = 's32[1]{0}', space=sflag, size = 0x4, scoped, tag = 'scoped memory for tpu_custom_call.1']
    #allocation8 [shape = 'u8[32768]{0}', space=vmem, size = 0x8000, scoped, tag = 'input window, operand 3, single buffered']
    #allocation9 [shape = 'u8[1048576]{0}', space=vmem, size = 0x100000, scoped, tag = 'input window, operand 5']
    #allocation10 [shape = 's32[2]{0}', space=sflag, size = 0x8, scoped, tag = 'scoped memory for tpu_custom_call.1']
    #allocation11 [shape = 'u8[16384]{0}', space=vmem, size = 0x4000, scoped, tag = 'input window, operand 6']
    #allocation12 [shape = 'u8[8192]{0}', space=vmem, size = 0x2000, scoped, tag = 'output window, operand 0, single buffered']
    #allocation13 [shape = 'u8[262144]{0}', space=vmem, size = 0x40000, scoped, tag = 'output window, operand 1']
    #allocation14 [shape = 's32[2]{0}', space=sflag, size = 0x8, scoped, tag = 'scoped memory for tpu_custom_call.1']
    %14 = vsyncpa [#allocation4], 0
    %15 = vsyncpa [#allocation7], 0
    %16 = vsyncpa [#allocation10], 0
    %s17 = scalar_lea.sflag [#allocation10], 1
    %18 = vsyncpa %s17, 0
    %19 = vsyncpa [#allocation5], 0
    %20 = vsyncpa [#allocation14], 0
    %s21 = scalar_lea.sflag [#allocation14], 1
    %22 = vsyncpa %s21, 0
    loop: start=0, step=1, limit=4
    $region2: #{tpu_custom_call.1} parent=1 // loop_pre_header
      _
    $region3: #{tpu_custom_call.1} parent=1 // loop_header
      %s24 = sphi 0, %s28
      %p25 = scmp.ge.s32.totalorder %s24, 4
      %s31 = sphi 0, %s43
      %s32 = sphi 0, %s39
      %s33 = sphi 0, %s31
      %s34 = sphi 0, %s32
      %s35 = sphi 0, %s33
      %s36 = sphi 0, %s34
      %s46 = sphi 0, %s48
      %s49 = sphi 0, %s46
      %s50 = sphi 0, %s49
      %s66 = sphi 0, %s50
      %s70 = sphi 0, %s70
      %s72 = sphi 0, %s70
      %s73 = sphi 0, %s72
      %s87 = sphi 0, %s73
      %s91 = sphi 0, %s91
      %s93 = sphi 0, %s91
      %s94 = sphi 0, %s93
      %s108 = sphi 0, %s94
      %s112 = sphi 0, %s112
      %s114 = sphi 0, %s112
      %s115 = sphi 0, %s114
      %s129 = sphi 0, %s115
      %s133 = sphi 0, %s133
      %s135 = sphi 0, %s133
      %s136 = sphi 0, %s135
      %s150 = sphi 0, %s136
      %s156 = sphi 0, %s158
      %s159 = sphi 0, %s156
      %s160 = sphi 0, %s159
      %s176 = sphi 0, %s160
      %s182 = sphi 0, %s184
      %s185 = sphi 0, %s182
      %s186 = sphi 0, %s185
      %s202 = sphi 0, %s186
      %s208 = sphi 0, %s210
      %s211 = sphi 0, %s208
      %s212 = sphi 0, %s211
      %s228 = sphi 0, %s212
      %s236 = sphi 0, %s238
      %s239 = sphi 0, %s236
      %s240 = sphi 0, %s239
      %s256 = sphi 0, %s240
    $region4: #{tpu_custom_call.1} parent=1 // loop_header_branch
      %27 = sbr.rel (%p25) target = $region8
    $region5: #{tpu_custom_call.1} parent=1 // loop_body
      %s29 = ssub.s32 %s24, 1
      %s30 = ssub.s32 %s24, 2
      %s37 = sadd.s32 1, %s32
      %p38 = scmp.ge.s32.totalorder %s37, 2
      %s39 = scalar_select %p38, 0, %s37
      %s40 = sadd.s32 1, %s31
      %s41 = scalar_select %p38, %s40, %s31
      %p42 = scmp.ge.s32.totalorder %s41, 1
      %s43 = scalar_select %p42, 0, %s41
      %s44 = ssub.s32 %s31, %s43
      %p45 = scmp.eq.s32.totalorder %s44, 0
      %s47 = sadd.s32 %s46, 1
      %s48 = scalar_select %p45, %s46, %s47
      %p51 = pneg %p45
      %p52 = scmp.eq.s32.totalorder %s24, 1
      %p53 = por %p51, %p52
      %p54 = scmp.ne.s32.totalorder %s46, %s49
      %p55 = scmp.eq.s32.totalorder %s24, 0
      %p56 = por %p54, %p55
      %p57 = scmp.ne.s32.totalorder %s46, %s49
      %p58 = scmp.eq.s32.totalorder %s29, 1
      %p59 = por %p57, %p58
      %p60 = scmp.ne.s32.totalorder %s49, %s50
      %p61 = scmp.eq.s32.totalorder %s29, 0
      %p62 = por %p60, %p61
      %p63 = scmp.ne.s32.totalorder %s49, %s50
      %p64 = scmp.eq.s32.totalorder %s30, 1
      %p65 = por %p63, %p64
      %p67 = scmp.ne.s32.totalorder %s50, %s66
      %p68 = scmp.eq.s32.totalorder %s30, 0
      %p69 = por %p67, %p68
      %s71 = sadd.s32 %s70, 1
      %p74 = scmp.eq.s32.totalorder %s24, 1
      %p75 = scmp.ne.s32.totalorder %s70, %s72
      %p76 = scmp.eq.s32.totalorder %s24, 0
      %p77 = por %p75, %p76
      %p78 = scmp.ne.s32.totalorder %s70, %s72
      %p79 = scmp.eq.s32.totalorder %s29, 1
      %p80 = por %p78, %p79
      %p81 = scmp.ne.s32.totalorder %s72, %s73
      %p82 = scmp.eq.s32.totalorder %s29, 0
      %p83 = por %p81, %p82
      %p84 = scmp.ne.s32.totalorder %s72, %s73
      %p85 = scmp.eq.s32.totalorder %s30, 1
      %p86 = por %p84, %p85
      %p88 = scmp.ne.s32.totalorder %s73, %s87
      %p89 = scmp.eq.s32.totalorder %s30, 0
      %p90 = por %p88, %p89
      %s92 = sadd.s32 %s91, 1
      %p95 = scmp.eq.s32.totalorder %s24, 1
      %p96 = scmp.ne.s32.totalorder %s91, %s93
      %p97 = scmp.eq.s32.totalorder %s24, 0
      %p98 = por %p96, %p97
      %p99 = scmp.ne.s32.totalorder %s91, %s93
      %p100 = scmp.eq.s32.totalorder %s29, 1
      %p101 = por %p99, %p100
      %p102 = scmp.ne.s32.totalorder %s93, %s94
      %p103 = scmp.eq.s32.totalorder %s29, 0
      %p104 = por %p102, %p103
      %p105 = scmp.ne.s32.totalorder %s93, %s94
      %p106 = scmp.eq.s32.totalorder %s30, 1
      %p107 = por %p105, %p106
      %p109 = scmp.ne.s32.totalorder %s94, %s108
      %p110 = scmp.eq.s32.totalorder %s30, 0
      %p111 = por %p109, %p110
      %s113 = sadd.s32 %s112, 1
      %p116 = scmp.eq.s32.totalorder %s24, 1
      %p117 = scmp.ne.s32.totalorder %s112, %s114
      %p118 = scmp.eq.s32.totalorder %s24, 0
      %p119 = por %p117, %p118
      %p120 = scmp.ne.s32.totalorder %s112, %s114
      %p121 = scmp.eq.s32.totalorder %s29, 1
      %p122 = por %p120, %p121
      %p123 = scmp.ne.s32.totalorder %s114, %s115
      %p124 = scmp.eq.s32.totalorder %s29, 0
      %p125 = por %p123, %p124
      %p126 = scmp.ne.s32.totalorder %s114, %s115
      %p127 = scmp.eq.s32.totalorder %s30, 1
      %p128 = por %p126, %p127
      %p130 = scmp.ne.s32.totalorder %s115, %s129
      %p131 = scmp.eq.s32.totalorder %s30, 0
      %p132 = por %p130, %p131
      %s134 = sadd.s32 %s133, 1
      %p137 = scmp.eq.s32.totalorder %s24, 1
      %p138 = scmp.ne.s32.totalorder %s133, %s135
      %p139 = scmp.eq.s32.totalorder %s24, 0
      %p140 = por %p138, %p139
      %p141 = scmp.ne.s32.totalorder %s133, %s135
      %p142 = scmp.eq.s32.totalorder %s29, 1
      %p143 = por %p141, %p142
      %p144 = scmp.ne.s32.totalorder %s135, %s136
      %p145 = scmp.eq.s32.totalorder %s29, 0
      %p146 = por %p144, %p145
      %p147 = scmp.ne.s32.totalorder %s135, %s136
      %p148 = scmp.eq.s32.totalorder %s30, 1
      %p149 = por %p147, %p148
      %p151 = scmp.ne.s32.totalorder %s136, %s150
      %p152 = scmp.eq.s32.totalorder %s30, 0
      %p153 = por %p151, %p152
      %s154 = ssub.s32 %s32, %s39
      %p155 = scmp.eq.s32.totalorder %s154, 0
      %s157 = sadd.s32 %s156, 1
      %s158 = scalar_select %p155, %s156, %s157
      %p161 = pneg %p155
      %p162 = scmp.eq.s32.totalorder %s24, 1
      %p163 = por %p161, %p162
      %p164 = scmp.ne.s32.totalorder %s156, %s159
      %p165 = scmp.eq.s32.totalorder %s24, 0
      %p166 = por %p164, %p165
      %p167 = scmp.ne.s32.totalorder %s156, %s159
      %p168 = scmp.eq.s32.totalorder %s29, 1
      %p169 = por %p167, %p168
      %p170 = scmp.ne.s32.totalorder %s159, %s160
      %p171 = scmp.eq.s32.totalorder %s29, 0
      %p172 = por %p170, %p171
      %p173 = scmp.ne.s32.totalorder %s159, %s160
      %p174 = scmp.eq.s32.totalorder %s30, 1
      %p175 = por %p173, %p174
      %p177 = scmp.ne.s32.totalorder %s160, %s176
      %p178 = scmp.eq.s32.totalorder %s30, 0
      %p179 = por %p177, %p178
      %s180 = ssub.s32 %s32, %s39
      %p181 = scmp.eq.s32.totalorder %s180, 0
      %s183 = sadd.s32 %s182, 1
      %s184 = scalar_select %p181, %s182, %s183
      %p187 = pneg %p181
      %p188 = scmp.eq.s32.totalorder %s24, 1
      %p189 = por %p187, %p188
      %p190 = scmp.ne.s32.totalorder %s182, %s185
      %p191 = scmp.eq.s32.totalorder %s24, 0
      %p192 = por %p190, %p191
      %p193 = scmp.ne.s32.totalorder %s182, %s185
      %p194 = scmp.eq.s32.totalorder %s29, 1
      %p195 = por %p193, %p194
      %p196 = scmp.ne.s32.totalorder %s185, %s186
      %p197 = scmp.eq.s32.totalorder %s29, 0
      %p198 = por %p196, %p197
      %p199 = scmp.ne.s32.totalorder %s185, %s186
      %p200 = scmp.eq.s32.totalorder %s30, 1
      %p201 = por %p199, %p200
      %p203 = scmp.ne.s32.totalorder %s186, %s202
      %p204 = scmp.eq.s32.totalorder %s30, 0
      %p205 = por %p203, %p204
      %s206 = ssub.s32 %s31, %s43
      %p207 = scmp.eq.s32.totalorder %s206, 0
      %s209 = sadd.s32 %s208, 1
      %s210 = scalar_select %p207, %s208, %s209
      %p213 = pneg %p207
      %p214 = scmp.eq.s32.totalorder %s24, 1
      %p215 = por %p213, %p214
      %p216 = scmp.ne.s32.totalorder %s208, %s211
      %p217 = scmp.eq.s32.totalorder %s24, 0
      %p218 = por %p216, %p217
      %p219 = scmp.ne.s32.totalorder %s208, %s211
      %p220 = scmp.eq.s32.totalorder %s29, 1
      %p221 = por %p219, %p220
      %p222 = scmp.ne.s32.totalorder %s211, %s212
      %p223 = scmp.eq.s32.totalorder %s29, 0
      %p224 = por %p222, %p223
      %p225 = scmp.ne.s32.totalorder %s211, %s212
      %p226 = scmp.eq.s32.totalorder %s30, 1
      %p227 = por %p225, %p226
      %p229 = scmp.ne.s32.totalorder %s212, %s228
      %p230 = scmp.eq.s32.totalorder %s30, 0
      %p231 = por %p229, %p230
      %s232 = ssub.s32 %s31, %s43
      %s233 = ssub.s32 %s32, %s39
      %s234 = sor.u32 %s232, %s233
      %p235 = scmp.eq.s32.totalorder %s234, 0
      %s237 = sadd.s32 %s236, 1
      %s238 = scalar_select %p235, %s236, %s237
      %p241 = pneg %p235
      %p242 = scmp.eq.s32.totalorder %s24, 1
      %p243 = por %p241, %p242
      %p244 = scmp.ne.s32.totalorder %s236, %s239
      %p245 = scmp.eq.s32.totalorder %s24, 0
      %p246 = por %p244, %p245
      %p247 = scmp.ne.s32.totalorder %s236, %s239
      %p248 = scmp.eq.s32.totalorder %s29, 1
      %p249 = por %p247, %p248
      %p250 = scmp.ne.s32.totalorder %s239, %s240
      %p251 = scmp.eq.s32.totalorder %s29, 0
      %p252 = por %p250, %p251
      %p253 = scmp.ne.s32.totalorder %s239, %s240
      %p254 = scmp.eq.s32.totalorder %s30, 1
      %p255 = por %p253, %p254
      %p257 = scmp.ne.s32.totalorder %s240, %s256
      %p258 = scmp.eq.s32.totalorder %s30, 0
      %p259 = por %p257, %p258
      %p260 = scmp.le.s32.totalorder 1, %s24
      %p261 = scmp.lt.s32.totalorder %s24, 3
      %p262 = pnand %p260, %p261
      %p263 = pneg %p262
      // Predicated region
      $region9: #{tpu_custom_call.1} parent=5 // pred_check
        _
      $region10: #{tpu_custom_call.1} parent=5 // pred_check_branch
        %265 = sbr.rel (%p262) target = $region12
      $region11: #{tpu_custom_call.1} parent=5 // pred_region
        %s266 = ssub.s32 %s24, 1
        // Predicated region
        $region13: #{tpu_custom_call.1} parent=11 // pred_check
          %p267 = pneg %p62
        $region14: #{tpu_custom_call.1} parent=11 // pred_check_branch
          %269 = sbr.rel (%p267) target = $region16
        $region15: #{tpu_custom_call.1} parent=11 // pred_region
          %s270 = smul.u32 2, %s33
          %s272 = ssub.s32 256, 256
          %273 = vsyncadd [#allocation4], %s272
          %s274 = smul.addr %s270, 128
          %s275 = scalar_lea.hbm %s0, %s274
          %s276 = sshll.u32 [#allocation3], 4
          %s277 = int_to_ptr.vmem [resolvable:$true] %s276
          %282 = dma.hbm_to_vmem [thread:$0]  %s275, 256, %s277, [#allocation4], 128, 128, 8
        $region16: #{tpu_custom_call.1} parent=11 // pred_fallthru
          _
        // Predicated region
        $region17: #{tpu_custom_call.1} parent=11 // pred_check
          %p283 = pneg %p83
        $region18: #{tpu_custom_call.1} parent=11 // pred_check_branch
          %285 = sbr.rel (%p283) target = $region20
        $region19: #{tpu_custom_call.1} parent=11 // pred_region
          %s287 = ssub.s32 256, 256
          %288 = vsyncadd [#allocation7], %s287
          %s289 = sshll.u32 [#allocation6], 4
          %s290 = int_to_ptr.vmem [resolvable:$true] %s289
          %295 = dma.hbm_to_vmem [thread:$0]  %s1, 256, %s290, [#allocation7], 64, 64, 4
        $region20: #{tpu_custom_call.1} parent=11 // pred_fallthru
          _
        // Predicated region
        $region21: #{tpu_custom_call.1} parent=11 // pred_check
          %p296 = pneg %p104
        $region22: #{tpu_custom_call.1} parent=11 // pred_check_branch
          %298 = sbr.rel (%p296) target = $region24
        $region23: #{tpu_custom_call.1} parent=11 // pred_region
          _
        $region24: #{tpu_custom_call.1} parent=11 // pred_fallthru
          _
        // Predicated region
        $region25: #{tpu_custom_call.1} parent=11 // pred_check
          %p299 = pneg %p125
        $region26: #{tpu_custom_call.1} parent=11 // pred_check_branch
          %301 = sbr.rel (%p299) target = $region28
        $region27: #{tpu_custom_call.1} parent=11 // pred_region
          %s303 = ssub.s32 1024, 1024
          %304 = vsyncadd [#allocation7], %s303
          %s305 = sshll.u32 [#allocation8], 4
          %s306 = int_to_ptr.vmem [resolvable:$true] %s305
          %311 = dma.hbm_to_vmem [thread:$0]  %s3, 1024, %s306, [#allocation7], 64, 64, 4
        $region28: #{tpu_custom_call.1} parent=11 // pred_fallthru
          _
        // Predicated region
        $region29: #{tpu_custom_call.1} parent=11 // pred_check
          %p312 = pneg %p146
        $region30: #{tpu_custom_call.1} parent=11 // pred_check_branch
          %314 = sbr.rel (%p312) target = $region32
        $region31: #{tpu_custom_call.1} parent=11 // pred_region
          _
        $region32: #{tpu_custom_call.1} parent=11 // pred_fallthru
          _
      $region12: #{tpu_custom_call.1} parent=5 // pred_fallthru
        _
      %p315 = scmp.lt.s32.totalorder %s24, 2
      // Predicated region
      $region33: #{tpu_custom_call.1} parent=5 // pred_check
        %p316 = pneg %p315
      $region34: #{tpu_custom_call.1} parent=5 // pred_check_branch
        %318 = sbr.rel (%p316) target = $region36
      $region35: #{tpu_custom_call.1} parent=5 // pred_region
        // Predicated region
        $region37: #{tpu_custom_call.1} parent=35 // pred_check
          %p319 = pneg %p166
        $region38: #{tpu_custom_call.1} parent=35 // pred_check_branch
          %321 = sbr.rel (%p319) target = $region40
        $region39: #{tpu_custom_call.1} parent=35 // pred_region
          %s322 = sand.u32 %s24, 1
          %s323 = scalar_lea.sflag [#allocation10], %s322
          %s324 = sand.u32 %s156, 1
          %s325 = smul.addr %s324, 1024
          %s326 = scalar_lea.vmem [#allocation9], %s325
          %s327 = smul.u32 16, %s32
          %s329 = ssub.s32 16384, 16384
          %330 = vsyncadd %s323, %s329
          %s331 = smul.addr %s327, 64
          %s332 = scalar_lea.hbm %s5, %s331
          %s333 = sshll.u32 %s326, 4
          %s334 = int_to_ptr.vmem [resolvable:$true] %s333
          %339 = dma.hbm_to_vmem [thread:$0]  %s332, 16384, %s334, %s323, 2048, 1024, 64
        $region40: #{tpu_custom_call.1} parent=35 // pred_fallthru
          _
        // Predicated region
        $region41: #{tpu_custom_call.1} parent=35 // pred_check
          %p340 = pneg %p192
        $region42: #{tpu_custom_call.1} parent=35 // pred_check_branch
          %342 = sbr.rel (%p340) target = $region44
        $region43: #{tpu_custom_call.1} parent=35 // pred_region
          %s343 = sand.u32 %s24, 1
          %s344 = scalar_lea.sflag [#allocation10], %s343
          %s345 = sand.u32 %s182, 1
          %s346 = smul.addr %s345, 16
          %s347 = scalar_lea.vmem [#allocation11], %s346
          %s348 = smul.u32 16, %s32
          %s350 = ssub.s32 256, 256
          %351 = vsyncadd %s344, %s350
          %s352 = smul.addr %s348, 16
          %s353 = scalar_lea.hbm %s6, %s352
          %s355 = sshll.u32 %s347, 4
          %s356 = int_to_ptr.vmem [resolvable:$true] %s355
          %358 = dma.hbm_to_vmem [thread:$0]  %s353, 256, %s356, %s344
        $region44: #{tpu_custom_call.1} parent=35 // pred_fallthru
          _
      $region36: #{tpu_custom_call.1} parent=5 // pred_fallthru
        _
      %p359 = scmp.le.s32.totalorder 1, %s24
      %p360 = scmp.lt.s32.totalorder %s24, 3
      %p361 = pnand %p359, %p360
      %p362 = pneg %p361
      // Predicated region
      $region45: #{tpu_custom_call.1} parent=5 // pred_check
        _
      $region46: #{tpu_custom_call.1} parent=5 // pred_check_branch
        %364 = sbr.rel (%p361) target = $region48
      $region47: #{tpu_custom_call.1} parent=5 // pred_region
        %s365 = ssub.s32 %s24, 1
        // Predicated region
        $region49: #{tpu_custom_call.1} parent=47 // pred_check
          %p366 = pneg %p62
        $region50: #{tpu_custom_call.1} parent=47 // pred_check_branch
          %368 = sbr.rel (%p366) target = $region52
        $region51: #{tpu_custom_call.1} parent=47 // pred_region
          %369 = dma.done [#allocation4], 256
        $region52: #{tpu_custom_call.1} parent=47 // pred_fallthru
          _
        // Predicated region
        $region53: #{tpu_custom_call.1} parent=47 // pred_check
          %p370 = pneg %p83
        $region54: #{tpu_custom_call.1} parent=47 // pred_check_branch
          %372 = sbr.rel (%p370) target = $region56
        $region55: #{tpu_custom_call.1} parent=47 // pred_region
          %373 = dma.done [#allocation7], 256
        $region56: #{tpu_custom_call.1} parent=47 // pred_fallthru
          _
        // Predicated region
        $region57: #{tpu_custom_call.1} parent=47 // pred_check
          %p374 = pneg %p125
        $region58: #{tpu_custom_call.1} parent=47 // pred_check_branch
          %376 = sbr.rel (%p374) target = $region60
        $region59: #{tpu_custom_call.1} parent=47 // pred_region
          %377 = dma.done [#allocation7], 1024
        $region60: #{tpu_custom_call.1} parent=47 // pred_fallthru
          _
        %s378 = sand.u32 %s29, 1
        %s379 = scalar_lea.sflag [#allocation10], %s378
        %s380 = sand.u32 %s159, 1
        %s381 = smul.addr %s380, 1024
        %s382 = scalar_lea.vmem [#allocation9], %s381
        // Predicated region
        $region61: #{tpu_custom_call.1} parent=47 // pred_check
          %p383 = pneg %p172
        $region62: #{tpu_custom_call.1} parent=47 // pred_check_branch
          %385 = sbr.rel (%p383) target = $region64
        $region63: #{tpu_custom_call.1} parent=47 // pred_region
          %386 = dma.done %s379, 16384
        $region64: #{tpu_custom_call.1} parent=47 // pred_fallthru
          _
        %s387 = sand.u32 %s29, 1
        %s388 = scalar_lea.sflag [#allocation10], %s387
        %s389 = sand.u32 %s185, 1
        %s390 = smul.addr %s389, 16
        %s391 = scalar_lea.vmem [#allocation11], %s390
        // Predicated region
        $region65: #{tpu_custom_call.1} parent=47 // pred_check
          %p392 = pneg %p198
        $region66: #{tpu_custom_call.1} parent=47 // pred_check_branch
          %394 = sbr.rel (%p392) target = $region68
        $region67: #{tpu_custom_call.1} parent=47 // pred_region
          %395 = dma.done %s388, 256
        $region68: #{tpu_custom_call.1} parent=47 // pred_fallthru
          _
        %p396 = pneg %p62
        %p397 = pneg %p59
        %p398 = pneg %p83
        %p399 = pneg %p80
        %p400 = pneg %p104
        %p401 = pneg %p101
        %p402 = pneg %p125
        %p403 = pneg %p122
        %p404 = pneg %p146
        %p405 = pneg %p143
        %s406 = sand.u32 %s29, 1
        %s407 = scalar_lea.sflag [#allocation10], %s406
        %s408 = sand.u32 %s159, 1
        %s409 = smul.addr %s408, 1024
        %s410 = scalar_lea.vmem [#allocation9], %s409
        %p411 = pneg %p172
        %p412 = pneg %p169
        %s413 = sand.u32 %s29, 1
        %s414 = scalar_lea.sflag [#allocation10], %s413
        %s415 = sand.u32 %s185, 1
        %s416 = smul.addr %s415, 16
        %s417 = scalar_lea.vmem [#allocation11], %s416
        %p418 = pneg %p198
        %p419 = pneg %p195
        %p420 = pneg %p224
        %p421 = pneg %p221
        %p422 = pneg %p252
        %p423 = pneg %p249
        %s424 = sand.u32 %s239, 1
        %s425 = scalar_lea.sflag [#allocation14], %s424
        %s426 = sand.u32 %s239, 1
        %s427 = smul.addr %s426, 256
        %s428 = scalar_lea.vmem [#allocation13], %s427
        %s429 = smul.u32 2, %s33
        %s430 = smul.u32 16, %s34
        %s431 = smul.u32 16, %s34
        %s432 = smul.u32 2, %s33
        %s433 = smul.u32 2, %s33
        %s434 = smul.u32 16, %s34
        %p436 = scmp.eq.s32.totalorder %s34, 0
        // Predicated region
        $region69: #{tpu_custom_call.1} parent=47 // pred_check
          %p437 = pneg %p436
        $region70: #{tpu_custom_call.1} parent=47 // pred_check_branch
          %439 = sbr.rel (%p437) target = $region72
        $region71: #{tpu_custom_call.1} parent=47 // pred_region
          %v440 = vld [vmem:[#allocation3] sm:$0xff]
          %v441 = vld [vmem:[#allocation3 + $0x8] sm:$0xff]
          %v442 = vpack.c.bf16 %v441, %v440
          %v443 = vld [vmem:[#allocation6] sm:$0xf]
          %v444 = vld [vmem:[#allocation6 + $0x4] sm:$0xf]
          %v445 = vld [vmem:[#allocation6 + $0x8] sm:$0xf]
          %v446 = vld [vmem:[#allocation6 + $0xc] sm:$0xf]
          %v447 = vld [vmem:[%s2] sm:$0x1]
          %v449 = vlaneseq
          %v450 = vshrl.u32 %v449, 7
          %v451 = vsub.s32 0, %v450
          %v452 = vrot.slane %v447, %v451
          %v458 = vunpack.c.l.b16 %v443
          %v459 = vunpack.c.l.b16 %v444
          %v460 = vunpack.c.l.b16 %v445
          %v461 = vunpack.c.l.b16 %v446
          %v462 = vpack.c.b16 %v459, %v458
          %v463 = vpack.c.b16 %v461, %v460
          %vm466 = vcmask 261120
          %v468 = vsel %vm466, %v442, 0
          %470 = vmatprep.subr.bf16.mxu0 0
          %471 = vmatpush1.bf16.msra.mxu0 %v462
          %472 = vmatprep.subr.bf16.mxu0 0
          %473 = vmatpush1.bf16.msra.mxu0 %v463
          %474 = vmatprep.subr.bf16.mxu0 0
          %475 = vmatpush1.bf16.msra.mxu0 0
          %476 = vmatprep.subr.bf16.mxu0 0
          %477 = vmatpush1.bf16.msra.mxu0 0
          %478 = vmatprep.subr.bf16.mxu0 0
          %479 = vmatpush1.bf16.msra.mxu0 0
          %480 = vmatprep.subr.bf16.mxu0 0
          %481 = vmatpush1.bf16.msra.mxu0 0
          %482 = vmatprep.subr.bf16.mxu0 0
          %483 = vmatpush1.bf16.msra.mxu0 0
          %484 = vmatprep.subr.bf16.mxu0 0
          %485 = vmatpush1.bf16.msra.mxu0 0
          %486 = vmatprep.subr.bf16.mxu0 0
          %487 = vmatpush1.bf16.msra.mxu0 0
          %488 = vmatprep.subr.bf16.mxu0 0
          %489 = vmatpush1.bf16.msra.mxu0 0
          %490 = vmatprep.subr.bf16.mxu0 0
          %491 = vmatpush1.bf16.msra.mxu0 0
          %492 = vmatprep.subr.bf16.mxu0 0
          %493 = vmatpush1.bf16.msra.mxu0 0
          %494 = vmatprep.subr.bf16.mxu0 0
          %495 = vmatpush1.bf16.msra.mxu0 0
          %496 = vmatprep.subr.bf16.mxu0 0
          %497 = vmatpush1.bf16.msra.mxu0 0
          %498 = vmatprep.subr.bf16.mxu0 0
          %499 = vmatpush1.bf16.msra.mxu0 0
          %500 = vmatprep.subr.bf16.mxu0 0
          %501 = vmatpush1.bf16.msra.mxu0 0
          %502 = vmatprep.mubr.bf16.mxu0 0
          %503 = vmatmul.mubr.bf16.gmra.mrb[0].mxu0 %v468
          %v504 = vpop.f32.mrb[0].mxu0
          %v505 = vadd.f32 %v452, %v504
          %v506 = vpop.f32.mrb[0].mxu0
          %v507 = vpop.f32.mrb[0].mxu0
          %v508 = vadd.f32 %v452, %v507
          %v509 = vpop.f32.mrb[0].mxu0
          %510 = vdwg.mxu0
          %v511 = vmul.f32 %v505, 0.5
          %v512 = vmul.f32 %v508, 0.5
          %v513 = vmul.f32 %v505, 0.044715
          %v514 = vmul.f32 %v508, 0.044715
          %v515 = vmul.f32 %v513, %v505
          %v516 = vmul.f32 %v514, %v508
          %v517 = vmul.f32 %v515, %v505
          %v518 = vmul.f32 %v516, %v508
          %v519 = vadd.f32 %v505, %v517
          %v520 = vadd.f32 %v508, %v518
          %v521 = vmul.f32 %v519, 0.7978846
          %v522 = vmul.f32 %v520, 0.7978846
          %v523 = vtanh.pop %v521
          %v524 = vtanh.pop %v522
          %v525 = vadd.f32 %v523, 1.0
          %v526 = vadd.f32 %v524, 1.0
          %v527 = vmul.f32 %v511, %v525
          %v528 = vmul.f32 %v512, %v526
          %v529 = vpack.c.bf16 %v528, %v527
          %530 = vst [vmem:[#allocation2] sm:$0xff] %v529
        $region72: #{tpu_custom_call.1} parent=47 // pred_fallthru
          _
        %v531 = vld [vmem:[#allocation2] sm:$0xff]
        %v532 = vld [vmem:[%s382] sm:$0xff]
        %v533 = vld [vmem:[%s382 + $0x8] sm:$0xff]
        %v534 = vld [vmem:[%s382 + $0x10] sm:$0xff]
        %v535 = vld [vmem:[%s382 + $0x18] sm:$0xff]
        %v536 = vld [vmem:[%s382 + $0x20] sm:$0xff]
        %v537 = vld [vmem:[%s382 + $0x28] sm:$0xff]
        %v538 = vld [vmem:[%s382 + $0x30] sm:$0xff]
        %v539 = vld [vmem:[%s382 + $0x38] sm:$0xff]
        %v540 = vld [vmem:[%s382 + $0x40] sm:$0xff]
        %v541 = vld [vmem:[%s382 + $0x48] sm:$0xff]
        %v542 = vld [vmem:[%s382 + $0x50] sm:$0xff]
        %v543 = vld [vmem:[%s382 + $0x58] sm:$0xff]
        %v544 = vld [vmem:[%s382 + $0x60] sm:$0xff]
        %v545 = vld [vmem:[%s382 + $0x68] sm:$0xff]
        %v546 = vld [vmem:[%s382 + $0x70] sm:$0xff]
        %v547 = vld [vmem:[%s382 + $0x78] sm:$0xff]
        %v548 = vld [vmem:[%s382 + $0x80] sm:$0xff]
        %v549 = vld [vmem:[%s382 + $0x88] sm:$0xff]
        %v550 = vld [vmem:[%s382 + $0x90] sm:$0xff]
        %v551 = vld [vmem:[%s382 + $0x98] sm:$0xff]
        %v552 = vld [vmem:[%s382 + $0xa0] sm:$0xff]
        %v553 = vld [vmem:[%s382 + $0xa8] sm:$0xff]
        %v554 = vld [vmem:[%s382 + $0xb0] sm:$0xff]
        %v555 = vld [vmem:[%s382 + $0xb8] sm:$0xff]
        %v556 = vld [vmem:[%s382 + $0xc0] sm:$0xff]
        %v557 = vld [vmem:[%s382 + $0xc8] sm:$0xff]
        %v558 = vld [vmem:[%s382 + $0xd0] sm:$0xff]
        %v559 = vld [vmem:[%s382 + $0xd8] sm:$0xff]
        %v560 = vld [vmem:[%s382 + $0xe0] sm:$0xff]
        %v561 = vld [vmem:[%s382 + $0xe8] sm:$0xff]
        %v562 = vld [vmem:[%s382 + $0xf0] sm:$0xff]
        %v563 = vld [vmem:[%s382 + $0xf8] sm:$0xff]
        %v564 = vld [vmem:[%s382 + $0x100] sm:$0xff]
        %v565 = vld [vmem:[%s382 + $0x108] sm:$0xff]
        %v566 = vld [vmem:[%s382 + $0x110] sm:$0xff]
        %v567 = vld [vmem:[%s382 + $0x118] sm:$0xff]
        %v568 = vld [vmem:[%s382 + $0x120] sm:$0xff]
        %v569 = vld [vmem:[%s382 + $0x128] sm:$0xff]
        %v570 = vld [vmem:[%s382 + $0x130] sm:$0xff]
        %v571 = vld [vmem:[%s382 + $0x138] sm:$0xff]
        %v572 = vld [vmem:[%s382 + $0x140] sm:$0xff]
        %v573 = vld [vmem:[%s382 + $0x148] sm:$0xff]
        %v574 = vld [vmem:[%s382 + $0x150] sm:$0xff]
        %v575 = vld [vmem:[%s382 + $0x158] sm:$0xff]
        %v576 = vld [vmem:[%s382 + $0x160] sm:$0xff]
        %v577 = vld [vmem:[%s382 + $0x168] sm:$0xff]
        %v578 = vld [vmem:[%s382 + $0x170] sm:$0xff]
        %v579 = vld [vmem:[%s382 + $0x178] sm:$0xff]
        %v580 = vld [vmem:[%s382 + $0x180] sm:$0xff]
        %v581 = vld [vmem:[%s382 + $0x188] sm:$0xff]
        %v582 = vld [vmem:[%s382 + $0x190] sm:$0xff]
        %v583 = vld [vmem:[%s382 + $0x198] sm:$0xff]
        %v584 = vld [vmem:[%s382 + $0x1a0] sm:$0xff]
        %v585 = vld [vmem:[%s382 + $0x1a8] sm:$0xff]
        %v586 = vld [vmem:[%s382 + $0x1b0] sm:$0xff]
        %v587 = vld [vmem:[%s382 + $0x1b8] sm:$0xff]
        %v588 = vld [vmem:[%s382 + $0x1c0] sm:$0xff]
        %v589 = vld [vmem:[%s382 + $0x1c8] sm:$0xff]
        %v590 = vld [vmem:[%s382 + $0x1d0] sm:$0xff]
        %v591 = vld [vmem:[%s382 + $0x1d8] sm:$0xff]
        %v592 = vld [vmem:[%s382 + $0x1e0] sm:$0xff]
        %v593 = vld [vmem:[%s382 + $0x1e8] sm:$0xff]
        %v594 = vld [vmem:[%s382 + $0x1f0] sm:$0xff]
        %v595 = vld [vmem:[%s382 + $0x1f8] sm:$0xff]
        %v596 = vld [vmem:[%s382 + $0x200] sm:$0xff]
        %v597 = vld [vmem:[%s382 + $0x208] sm:$0xff]
        %v598 = vld [vmem:[%s382 + $0x210] sm:$0xff]
        %v599 = vld [vmem:[%s382 + $0x218] sm:$0xff]
        %v600 = vld [vmem:[%s382 + $0x220] sm:$0xff]
        %v601 = vld [vmem:[%s382 + $0x228] sm:$0xff]
        %v602 = vld [vmem:[%s382 + $0x230] sm:$0xff]
        %v603 = vld [vmem:[%s382 + $0x238] sm:$0xff]
        %v604 = vld [vmem:[%s382 + $0x240] sm:$0xff]
        %v605 = vld [vmem:[%s382 + $0x248] sm:$0xff]
        %v606 = vld [vmem:[%s382 + $0x250] sm:$0xff]
        %v607 = vld [vmem:[%s382 + $0x258] sm:$0xff]
        %v608 = vld [vmem:[%s382 + $0x260] sm:$0xff]
        %v609 = vld [vmem:[%s382 + $0x268] sm:$0xff]
        %v610 = vld [vmem:[%s382 + $0x270] sm:$0xff]
        %v611 = vld [vmem:[%s382 + $0x278] sm:$0xff]
        %v612 = vld [vmem:[%s382 + $0x280] sm:$0xff]
        %v613 = vld [vmem:[%s382 + $0x288] sm:$0xff]
        %v614 = vld [vmem:[%s382 + $0x290] sm:$0xff]
        %v615 = vld [vmem:[%s382 + $0x298] sm:$0xff]
        %v616 = vld [vmem:[%s382 + $0x2a0] sm:$0xff]
        %v617 = vld [vmem:[%s382 + $0x2a8] sm:$0xff]
        %v618 = vld [vmem:[%s382 + $0x2b0] sm:$0xff]
        %v619 = vld [vmem:[%s382 + $0x2b8] sm:$0xff]
        %v620 = vld [vmem:[%s382 + $0x2c0] sm:$0xff]
        %v621 = vld [vmem:[%s382 + $0x2c8] sm:$0xff]
        %v622 = vld [vmem:[%s382 + $0x2d0] sm:$0xff]
        %v623 = vld [vmem:[%s382 + $0x2d8] sm:$0xff]
        %v624 = vld [vmem:[%s382 + $0x2e0] sm:$0xff]
        %v625 = vld [vmem:[%s382 + $0x2e8] sm:$0xff]
        %v626 = vld [vmem:[%s382 + $0x2f0] sm:$0xff]
        %v627 = vld [vmem:[%s382 + $0x2f8] sm:$0xff]
        %v628 = vld [vmem:[%s382 + $0x300] sm:$0xff]
        %v629 = vld [vmem:[%s382 + $0x308] sm:$0xff]
        %v630 = vld [vmem:[%s382 + $0x310] sm:$0xff]
        %v631 = vld [vmem:[%s382 + $0x318] sm:$0xff]
        %v632 = vld [vmem:[%s382 + $0x320] sm:$0xff]
        %v633 = vld [vmem:[%s382 + $0x328] sm:$0xff]
        %v634 = vld [vmem:[%s382 + $0x330] sm:$0xff]
        %v635 = vld [vmem:[%s382 + $0x338] sm:$0xff]
        %v636 = vld [vmem:[%s382 + $0x340] sm:$0xff]
        %v637 = vld [vmem:[%s382 + $0x348] sm:$0xff]
        %v638 = vld [vmem:[%s382 + $0x350] sm:$0xff]
        %v639 = vld [vmem:[%s382 + $0x358] sm:$0xff]
        %v640 = vld [vmem:[%s382 + $0x360] sm:$0xff]
        %v641 = vld [vmem:[%s382 + $0x368] sm:$0xff]
        %v642 = vld [vmem:[%s382 + $0x370] sm:$0xff]
        %v643 = vld [vmem:[%s382 + $0x378] sm:$0xff]
        %v644 = vld [vmem:[%s382 + $0x380] sm:$0xff]
        %v645 = vld [vmem:[%s382 + $0x388] sm:$0xff]
        %v646 = vld [vmem:[%s382 + $0x390] sm:$0xff]
        %v647 = vld [vmem:[%s382 + $0x398] sm:$0xff]
        %v648 = vld [vmem:[%s382 + $0x3a0] sm:$0xff]
        %v649 = vld [vmem:[%s382 + $0x3a8] sm:$0xff]
        %v650 = vld [vmem:[%s382 + $0x3b0] sm:$0xff]
        %v651 = vld [vmem:[%s382 + $0x3b8] sm:$0xff]
        %v652 = vld [vmem:[%s382 + $0x3c0] sm:$0xff]
        %v653 = vld [vmem:[%s382 + $0x3c8] sm:$0xff]
        %v654 = vld [vmem:[%s382 + $0x3d0] sm:$0xff]
        %v655 = vld [vmem:[%s382 + $0x3d8] sm:$0xff]
        %v656 = vld [vmem:[%s382 + $0x3e0] sm:$0xff]
        %v657 = vld [vmem:[%s382 + $0x3e8] sm:$0xff]
        %v658 = vld [vmem:[%s382 + $0x3f0] sm:$0xff]
        %v659 = vld [vmem:[%s382 + $0x3f8] sm:$0xff]
        %v660 = vld [vmem:[%s391] sm:$0xff]
        %v661 = vld [vmem:[%s391 + $0x8] sm:$0xff]
        %v664 = vlaneseq
        %v665 = vshrl.u32 %v664, 7
        %v666 = vsub.s32 0, %v665
        %v667 = vrot.slane %v660, %v666
        %v668 = vlaneseq
        %v669 = vshrl.u32 %v668, 7
        %v670 = vsub.s32 1, %v669
        %v671 = vrot.slane %v660, %v670
        %v672 = vlaneseq
        %v673 = vshrl.u32 %v672, 7
        %v674 = vsub.s32 2, %v673
        %v675 = vrot.slane %v660, %v674
        %v676 = vlaneseq
        %v677 = vshrl.u32 %v676, 7
        %v678 = vsub.s32 3, %v677
        %v679 = vrot.slane %v660, %v678
        %v680 = vlaneseq
        %v681 = vshrl.u32 %v680, 7
        %v682 = vsub.s32 4, %v681
        %v683 = vrot.slane %v660, %v682
        %v684 = vlaneseq
        %v685 = vshrl.u32 %v684, 7
        %v686 = vsub.s32 5, %v685
        %v687 = vrot.slane %v660, %v686
        %v688 = vlaneseq
        %v689 = vshrl.u32 %v688, 7
        %v690 = vsub.s32 6, %v689
        %v691 = vrot.slane %v660, %v690
        %v692 = vlaneseq
        %v693 = vshrl.u32 %v692, 7
        %v694 = vsub.s32 7, %v693
        %v695 = vrot.slane %v660, %v694
        %v696 = vlaneseq
        %v697 = vshrl.u32 %v696, 7
        %v698 = vsub.s32 0, %v697
        %v699 = vrot.slane %v661, %v698
        %v700 = vlaneseq
        %v701 = vshrl.u32 %v700, 7
        %v702 = vsub.s32 1, %v701
        %v703 = vrot.slane %v661, %v702
        %v704 = vlaneseq
        %v705 = vshrl.u32 %v704, 7
        %v706 = vsub.s32 2, %v705
        %v707 = vrot.slane %v661, %v706
        %v708 = vlaneseq
        %v709 = vshrl.u32 %v708, 7
        %v710 = vsub.s32 3, %v709
        %v711 = vrot.slane %v661, %v710
        %v712 = vlaneseq
        %v713 = vshrl.u32 %v712, 7
        %v714 = vsub.s32 4, %v713
        %v715 = vrot.slane %v661, %v714
        %v716 = vlaneseq
        %v717 = vshrl.u32 %v716, 7
        %v718 = vsub.s32 5, %v717
        %v719 = vrot.slane %v661, %v718
        %v720 = vlaneseq
        %v721 = vshrl.u32 %v720, 7
        %v722 = vsub.s32 6, %v721
        %v723 = vrot.slane %v661, %v722
        %v724 = vlaneseq
        %v725 = vshrl.u32 %v724, 7
        %v726 = vsub.s32 7, %v725
        %v727 = vrot.slane %v661, %v726
        %v872 = vunpack.c.l.b16 %v532
        %v873 = vunpack.c.h.b16 %v532
        %v874 = vunpack.c.l.b16 %v533
        %v875 = vunpack.c.h.b16 %v533
        %v876 = vunpack.c.l.b16 %v534
        %v877 = vunpack.c.h.b16 %v534
        %v878 = vunpack.c.l.b16 %v535
        %v879 = vunpack.c.h.b16 %v535
        %v880 = vunpack.c.l.b16 %v536
        %v881 = vunpack.c.h.b16 %v536
        %v882 = vunpack.c.l.b16 %v537
        %v883 = vunpack.c.h.b16 %v537
        %v884 = vunpack.c.l.b16 %v538
        %v885 = vunpack.c.h.b16 %v538
        %v886 = vunpack.c.l.b16 %v539
        %v887 = vunpack.c.h.b16 %v539
        %v888 = vunpack.c.l.b16 %v540
        %v889 = vunpack.c.h.b16 %v540
        %v890 = vunpack.c.l.b16 %v541
        %v891 = vunpack.c.h.b16 %v541
        %v892 = vunpack.c.l.b16 %v542
        %v893 = vunpack.c.h.b16 %v542
        %v894 = vunpack.c.l.b16 %v543
        %v895 = vunpack.c.h.b16 %v543
        %v896 = vunpack.c.l.b16 %v544
        %v897 = vunpack.c.h.b16 %v544
        %v898 = vunpack.c.l.b16 %v545
        %v899 = vunpack.c.h.b16 %v545
        %v900 = vunpack.c.l.b16 %v546
        %v901 = vunpack.c.h.b16 %v546
        %v902 = vunpack.c.l.b16 %v547
        %v903 = vunpack.c.h.b16 %v547
        %v904 = vunpack.c.l.b16 %v548
        %v905 = vunpack.c.h.b16 %v548
        %v906 = vunpack.c.l.b16 %v549
        %v907 = vunpack.c.h.b16 %v549
        %v908 = vunpack.c.l.b16 %v550
        %v909 = vunpack.c.h.b16 %v550
        %v910 = vunpack.c.l.b16 %v551
        %v911 = vunpack.c.h.b16 %v551
        %v912 = vunpack.c.l.b16 %v552
        %v913 = vunpack.c.h.b16 %v552
        %v914 = vunpack.c.l.b16 %v553
        %v915 = vunpack.c.h.b16 %v553
        %v916 = vunpack.c.l.b16 %v554
        %v917 = vunpack.c.h.b16 %v554
        %v918 = vunpack.c.l.b16 %v555
        %v919 = vunpack.c.h.b16 %v555
        %v920 = vunpack.c.l.b16 %v556
        %v921 = vunpack.c.h.b16 %v556
        %v922 = vunpack.c.l.b16 %v557
        %v923 = vunpack.c.h.b16 %v557
        %v924 = vunpack.c.l.b16 %v558
        %v925 = vunpack.c.h.b16 %v558
        %v926 = vunpack.c.l.b16 %v559
        %v927 = vunpack.c.h.b16 %v559
        %v928 = vunpack.c.l.b16 %v560
        %v929 = vunpack.c.h.b16 %v560
        %v930 = vunpack.c.l.b16 %v561
        %v931 = vunpack.c.h.b16 %v561
        %v932 = vunpack.c.l.b16 %v562
        %v933 = vunpack.c.h.b16 %v562
        %v934 = vunpack.c.l.b16 %v563
        %v935 = vunpack.c.h.b16 %v563
        %v936 = vunpack.c.l.b16 %v564
        %v937 = vunpack.c.h.b16 %v564
        %v938 = vunpack.c.l.b16 %v565
        %v939 = vunpack.c.h.b16 %v565
        %v940 = vunpack.c.l.b16 %v566
        %v941 = vunpack.c.h.b16 %v566
        %v942 = vunpack.c.l.b16 %v567
        %v943 = vunpack.c.h.b16 %v567
        %v944 = vunpack.c.l.b16 %v568
        %v945 = vunpack.c.h.b16 %v568
        %v946 = vunpack.c.l.b16 %v569
        %v947 = vunpack.c.h.b16 %v569
        %v948 = vunpack.c.l.b16 %v570
        %v949 = vunpack.c.h.b16 %v570
        %v950 = vunpack.c.l.b16 %v571
        %v951 = vunpack.c.h.b16 %v571
        %v952 = vunpack.c.l.b16 %v572
        %v953 = vunpack.c.h.b16 %v572
        %v954 = vunpack.c.l.b16 %v573
        %v955 = vunpack.c.h.b16 %v573
        %v956 = vunpack.c.l.b16 %v574
        %v957 = vunpack.c.h.b16 %v574
        %v958 = vunpack.c.l.b16 %v575
        %v959 = vunpack.c.h.b16 %v575
        %v960 = vunpack.c.l.b16 %v576
        %v961 = vunpack.c.h.b16 %v576
        %v962 = vunpack.c.l.b16 %v577
        %v963 = vunpack.c.h.b16 %v577
        %v964 = vunpack.c.l.b16 %v578
        %v965 = vunpack.c.h.b16 %v578
        %v966 = vunpack.c.l.b16 %v579
        %v967 = vunpack.c.h.b16 %v579
        %v968 = vunpack.c.l.b16 %v580
        %v969 = vunpack.c.h.b16 %v580
        %v970 = vunpack.c.l.b16 %v581
        %v971 = vunpack.c.h.b16 %v581
        %v972 = vunpack.c.l.b16 %v582
        %v973 = vunpack.c.h.b16 %v582
        %v974 = vunpack.c.l.b16 %v583
        %v975 = vunpack.c.h.b16 %v583
        %v976 = vunpack.c.l.b16 %v584
        %v977 = vunpack.c.h.b16 %v584
        %v978 = vunpack.c.l.b16 %v585
        %v979 = vunpack.c.h.b16 %v585
        %v980 = vunpack.c.l.b16 %v586
        %v981 = vunpack.c.h.b16 %v586
        %v982 = vunpack.c.l.b16 %v587
        %v983 = vunpack.c.h.b16 %v587
        %v984 = vunpack.c.l.b16 %v588
        %v985 = vunpack.c.h.b16 %v588
        %v986 = vunpack.c.l.b16 %v589
        %v987 = vunpack.c.h.b16 %v589
        %v988 = vunpack.c.l.b16 %v590
        %v989 = vunpack.c.h.b16 %v590
        %v990 = vunpack.c.l.b16 %v591
        %v991 = vunpack.c.h.b16 %v591
        %v992 = vunpack.c.l.b16 %v592
        %v993 = vunpack.c.h.b16 %v592
        %v994 = vunpack.c.l.b16 %v593
        %v995 = vunpack.c.h.b16 %v593
        %v996 = vunpack.c.l.b16 %v594
        %v997 = vunpack.c.h.b16 %v594
        %v998 = vunpack.c.l.b16 %v595
        %v999 = vunpack.c.h.b16 %v595
        %v1000 = vunpack.c.l.b16 %v596
        %v1001 = vunpack.c.h.b16 %v596
        %v1002 = vunpack.c.l.b16 %v597
        %v1003 = vunpack.c.h.b16 %v597
        %v1004 = vunpack.c.l.b16 %v598
        %v1005 = vunpack.c.h.b16 %v598
        %v1006 = vunpack.c.l.b16 %v599
        %v1007 = vunpack.c.h.b16 %v599
        %v1008 = vunpack.c.l.b16 %v600
        %v1009 = vunpack.c.h.b16 %v600
        %v1010 = vunpack.c.l.b16 %v601
        %v1011 = vunpack.c.h.b16 %v601
        %v1012 = vunpack.c.l.b16 %v602
        %v1013 = vunpack.c.h.b16 %v602
        %v1014 = vunpack.c.l.b16 %v603
        %v1015 = vunpack.c.h.b16 %v603
        %v1016 = vunpack.c.l.b16 %v604
        %v1017 = vunpack.c.h.b16 %v604
        %v1018 = vunpack.c.l.b16 %v605
        %v1019 = vunpack.c.h.b16 %v605
        %v1020 = vunpack.c.l.b16 %v606
        %v1021 = vunpack.c.h.b16 %v606
        %v1022 = vunpack.c.l.b16 %v607
        %v1023 = vunpack.c.h.b16 %v607
        %v1024 = vunpack.c.l.b16 %v608
        %v1025 = vunpack.c.h.b16 %v608
        %v1026 = vunpack.c.l.b16 %v609
        %v1027 = vunpack.c.h.b16 %v609
        %v1028 = vunpack.c.l.b16 %v610
        %v1029 = vunpack.c.h.b16 %v610
        %v1030 = vunpack.c.l.b16 %v611
        %v1031 = vunpack.c.h.b16 %v611
        %v1032 = vunpack.c.l.b16 %v612
        %v1033 = vunpack.c.h.b16 %v612
        %v1034 = vunpack.c.l.b16 %v613
        %v1035 = vunpack.c.h.b16 %v613
        %v1036 = vunpack.c.l.b16 %v614
        %v1037 = vunpack.c.h.b16 %v614
        %v1038 = vunpack.c.l.b16 %v615
        %v1039 = vunpack.c.h.b16 %v615
        %v1040 = vunpack.c.l.b16 %v616
        %v1041 = vunpack.c.h.b16 %v616
        %v1042 = vunpack.c.l.b16 %v617
        %v1043 = vunpack.c.h.b16 %v617
        %v1044 = vunpack.c.l.b16 %v618
        %v1045 = vunpack.c.h.b16 %v618
        %v1046 = vunpack.c.l.b16 %v619
        %v1047 = vunpack.c.h.b16 %v619
        %v1048 = vunpack.c.l.b16 %v620
        %v1049 = vunpack.c.h.b16 %v620
        %v1050 = vunpack.c.l.b16 %v621
        %v1051 = vunpack.c.h.b16 %v621
        %v1052 = vunpack.c.l.b16 %v622
        %v1053 = vunpack.c.h.b16 %v622
        %v1054 = vunpack.c.l.b16 %v623
        %v1055 = vunpack.c.h.b16 %v623
        %v1056 = vunpack.c.l.b16 %v624
        %v1057 = vunpack.c.h.b16 %v624
        %v1058 = vunpack.c.l.b16 %v625
        %v1059 = vunpack.c.h.b16 %v625
        %v1060 = vunpack.c.l.b16 %v626
        %v1061 = vunpack.c.h.b16 %v626
        %v1062 = vunpack.c.l.b16 %v627
        %v1063 = vunpack.c.h.b16 %v627
        %v1064 = vunpack.c.l.b16 %v628
        %v1065 = vunpack.c.h.b16 %v628
        %v1066 = vunpack.c.l.b16 %v629
        %v1067 = vunpack.c.h.b16 %v629
        %v1068 = vunpack.c.l.b16 %v630
        %v1069 = vunpack.c.h.b16 %v630
        %v1070 = vunpack.c.l.b16 %v631
        %v1071 = vunpack.c.h.b16 %v631
        %v1072 = vunpack.c.l.b16 %v632
        %v1073 = vunpack.c.h.b16 %v632
        %v1074 = vunpack.c.l.b16 %v633
        %v1075 = vunpack.c.h.b16 %v633
        %v1076 = vunpack.c.l.b16 %v634
        %v1077 = vunpack.c.h.b16 %v634
        %v1078 = vunpack.c.l.b16 %v635
        %v1079 = vunpack.c.h.b16 %v635
        %v1080 = vunpack.c.l.b16 %v636
        %v1081 = vunpack.c.h.b16 %v636
        %v1082 = vunpack.c.l.b16 %v637
        %v1083 = vunpack.c.h.b16 %v637
        %v1084 = vunpack.c.l.b16 %v638
        %v1085 = vunpack.c.h.b16 %v638
        %v1086 = vunpack.c.l.b16 %v639
        %v1087 = vunpack.c.h.b16 %v639
        %v1088 = vunpack.c.l.b16 %v640
        %v1089 = vunpack.c.h.b16 %v640
        %v1090 = vunpack.c.l.b16 %v641
        %v1091 = vunpack.c.h.b16 %v641
        %v1092 = vunpack.c.l.b16 %v642
        %v1093 = vunpack.c.h.b16 %v642
        %v1094 = vunpack.c.l.b16 %v643
        %v1095 = vunpack.c.h.b16 %v643
        %v1096 = vunpack.c.l.b16 %v644
        %v1097 = vunpack.c.h.b16 %v644
        %v1098 = vunpack.c.l.b16 %v645
        %v1099 = vunpack.c.h.b16 %v645
        %v1100 = vunpack.c.l.b16 %v646
        %v1101 = vunpack.c.h.b16 %v646
        %v1102 = vunpack.c.l.b16 %v647
        %v1103 = vunpack.c.h.b16 %v647
        %v1104 = vunpack.c.l.b16 %v648
        %v1105 = vunpack.c.h.b16 %v648
        %v1106 = vunpack.c.l.b16 %v649
        %v1107 = vunpack.c.h.b16 %v649
        %v1108 = vunpack.c.l.b16 %v650
        %v1109 = vunpack.c.h.b16 %v650
        %v1110 = vunpack.c.l.b16 %v651
        %v1111 = vunpack.c.h.b16 %v651
        %v1112 = vunpack.c.l.b16 %v652
        %v1113 = vunpack.c.h.b16 %v652
        %v1114 = vunpack.c.l.b16 %v653
        %v1115 = vunpack.c.h.b16 %v653
        %v1116 = vunpack.c.l.b16 %v654
        %v1117 = vunpack.c.h.b16 %v654
        %v1118 = vunpack.c.l.b16 %v655
        %v1119 = vunpack.c.h.b16 %v655
        %v1120 = vunpack.c.l.b16 %v656
        %v1121 = vunpack.c.h.b16 %v656
        %v1122 = vunpack.c.l.b16 %v657
        %v1123 = vunpack.c.h.b16 %v657
        %v1124 = vunpack.c.l.b16 %v658
        %v1125 = vunpack.c.h.b16 %v658
        %v1126 = vunpack.c.l.b16 %v659
        %v1127 = vunpack.c.h.b16 %v659
        %v1128 = vpack.c.b16 %v888, %v872
        %v1129 = vpack.c.b16 %v889, %v873
        %v1130 = vpack.c.b16 %v890, %v874
        %v1131 = vpack.c.b16 %v891, %v875
        %v1132 = vpack.c.b16 %v892, %v876
        %v1133 = vpack.c.b16 %v893, %v877
        %v1134 = vpack.c.b16 %v894, %v878
        %v1135 = vpack.c.b16 %v895, %v879
        %v1136 = vpack.c.b16 %v896, %v880
        %v1137 = vpack.c.b16 %v897, %v881
        %v1138 = vpack.c.b16 %v898, %v882
        %v1139 = vpack.c.b16 %v899, %v883
        %v1140 = vpack.c.b16 %v900, %v884
        %v1141 = vpack.c.b16 %v901, %v885
        %v1142 = vpack.c.b16 %v902, %v886
        %v1143 = vpack.c.b16 %v903, %v887
        %v1144 = vpack.c.b16 %v920, %v904
        %v1145 = vpack.c.b16 %v921, %v905
        %v1146 = vpack.c.b16 %v922, %v906
        %v1147 = vpack.c.b16 %v923, %v907
        %v1148 = vpack.c.b16 %v924, %v908
        %v1149 = vpack.c.b16 %v925, %v909
        %v1150 = vpack.c.b16 %v926, %v910
        %v1151 = vpack.c.b16 %v927, %v911
        %v1152 = vpack.c.b16 %v928, %v912
        %v1153 = vpack.c.b16 %v929, %v913
        %v1154 = vpack.c.b16 %v930, %v914
        %v1155 = vpack.c.b16 %v931, %v915
        %v1156 = vpack.c.b16 %v932, %v916
        %v1157 = vpack.c.b16 %v933, %v917
        %v1158 = vpack.c.b16 %v934, %v918
        %v1159 = vpack.c.b16 %v935, %v919
        %v1160 = vpack.c.b16 %v952, %v936
        %v1161 = vpack.c.b16 %v953, %v937
        %v1162 = vpack.c.b16 %v954, %v938
        %v1163 = vpack.c.b16 %v955, %v939
        %v1164 = vpack.c.b16 %v956, %v940
        %v1165 = vpack.c.b16 %v957, %v941
        %v1166 = vpack.c.b16 %v958, %v942
        %v1167 = vpack.c.b16 %v959, %v943
        %v1168 = vpack.c.b16 %v960, %v944
        %v1169 = vpack.c.b16 %v961, %v945
        %v1170 = vpack.c.b16 %v962, %v946
        %v1171 = vpack.c.b16 %v963, %v947
        %v1172 = vpack.c.b16 %v964, %v948
        %v1173 = vpack.c.b16 %v965, %v949
        %v1174 = vpack.c.b16 %v966, %v950
        %v1175 = vpack.c.b16 %v967, %v951
        %v1176 = vpack.c.b16 %v984, %v968
        %v1177 = vpack.c.b16 %v985, %v969
        %v1178 = vpack.c.b16 %v986, %v970
        %v1179 = vpack.c.b16 %v987, %v971
        %v1180 = vpack.c.b16 %v988, %v972
        %v1181 = vpack.c.b16 %v989, %v973
        %v1182 = vpack.c.b16 %v990, %v974
        %v1183 = vpack.c.b16 %v991, %v975
        %v1184 = vpack.c.b16 %v992, %v976
        %v1185 = vpack.c.b16 %v993, %v977
        %v1186 = vpack.c.b16 %v994, %v978
        %v1187 = vpack.c.b16 %v995, %v979
        %v1188 = vpack.c.b16 %v996, %v980
        %v1189 = vpack.c.b16 %v997, %v981
        %v1190 = vpack.c.b16 %v998, %v982
        %v1191 = vpack.c.b16 %v999, %v983
        %v1192 = vpack.c.b16 %v1016, %v1000
        %v1193 = vpack.c.b16 %v1017, %v1001
        %v1194 = vpack.c.b16 %v1018, %v1002
        %v1195 = vpack.c.b16 %v1019, %v1003
        %v1196 = vpack.c.b16 %v1020, %v1004
        %v1197 = vpack.c.b16 %v1021, %v1005
        %v1198 = vpack.c.b16 %v1022, %v1006
        %v1199 = vpack.c.b16 %v1023, %v1007
        %v1200 = vpack.c.b16 %v1024, %v1008
        %v1201 = vpack.c.b16 %v1025, %v1009
        %v1202 = vpack.c.b16 %v1026, %v1010
        %v1203 = vpack.c.b16 %v1027, %v1011
        %v1204 = vpack.c.b16 %v1028, %v1012
        %v1205 = vpack.c.b16 %v1029, %v1013
        %v1206 = vpack.c.b16 %v1030, %v1014
        %v1207 = vpack.c.b16 %v1031, %v1015
        %v1208 = vpack.c.b16 %v1048, %v1032
        %v1209 = vpack.c.b16 %v1049, %v1033
        %v1210 = vpack.c.b16 %v1050, %v1034
        %v1211 = vpack.c.b16 %v1051, %v1035
        %v1212 = vpack.c.b16 %v1052, %v1036
        %v1213 = vpack.c.b16 %v1053, %v1037
        %v1214 = vpack.c.b16 %v1054, %v1038
        %v1215 = vpack.c.b16 %v1055, %v1039
        %v1216 = vpack.c.b16 %v1056, %v1040
        %v1217 = vpack.c.b16 %v1057, %v1041
        %v1218 = vpack.c.b16 %v1058, %v1042
        %v1219 = vpack.c.b16 %v1059, %v1043
        %v1220 = vpack.c.b16 %v1060, %v1044
        %v1221 = vpack.c.b16 %v1061, %v1045
        %v1222 = vpack.c.b16 %v1062, %v1046
        %v1223 = vpack.c.b16 %v1063, %v1047
        %v1224 = vpack.c.b16 %v1080, %v1064
        %v1225 = vpack.c.b16 %v1081, %v1065
        %v1226 = vpack.c.b16 %v1082, %v1066
        %v1227 = vpack.c.b16 %v1083, %v1067
        %v1228 = vpack.c.b16 %v1084, %v1068
        %v1229 = vpack.c.b16 %v1085, %v1069
        %v1230 = vpack.c.b16 %v1086, %v1070
        %v1231 = vpack.c.b16 %v1087, %v1071
        %v1232 = vpack.c.b16 %v1088, %v1072
        %v1233 = vpack.c.b16 %v1089, %v1073
        %v1234 = vpack.c.b16 %v1090, %v1074
        %v1235 = vpack.c.b16 %v1091, %v1075
        %v1236 = vpack.c.b16 %v1092, %v1076
        %v1237 = vpack.c.b16 %v1093, %v1077
        %v1238 = vpack.c.b16 %v1094, %v1078
        %v1239 = vpack.c.b16 %v1095, %v1079
        %v1240 = vpack.c.b16 %v1112, %v1096
        %v1241 = vpack.c.b16 %v1113, %v1097
        %v1242 = vpack.c.b16 %v1114, %v1098
        %v1243 = vpack.c.b16 %v1115, %v1099
        %v1244 = vpack.c.b16 %v1116, %v1100
        %v1245 = vpack.c.b16 %v1117, %v1101
        %v1246 = vpack.c.b16 %v1118, %v1102
        %v1247 = vpack.c.b16 %v1119, %v1103
        %v1248 = vpack.c.b16 %v1120, %v1104
        %v1249 = vpack.c.b16 %v1121, %v1105
        %v1250 = vpack.c.b16 %v1122, %v1106
        %v1251 = vpack.c.b16 %v1123, %v1107
        %v1252 = vpack.c.b16 %v1124, %v1108
        %v1253 = vpack.c.b16 %v1125, %v1109
        %v1254 = vpack.c.b16 %v1126, %v1110
        %v1255 = vpack.c.b16 %v1127, %v1111
        %1384 = vmatprep.subr.bf16.mxu0 %v1129
        %1385 = vmatpush1.bf16.msra.mxu0 %v1128
        %1386 = vmatprep.subr.bf16.mxu0 %v1145
        %1387 = vmatpush1.bf16.msra.mxu0 %v1144
        %1388 = vmatprep.subr.bf16.mxu0 %v1161
        %1389 = vmatpush1.bf16.msra.mxu0 %v1160
        %1390 = vmatprep.subr.bf16.mxu0 %v1177
        %1391 = vmatpush1.bf16.msra.mxu0 %v1176
        %1392 = vmatprep.subr.bf16.mxu0 %v1193
        %1393 = vmatpush1.bf16.msra.mxu0 %v1192
        %1394 = vmatprep.subr.bf16.mxu0 %v1209
        %1395 = vmatpush1.bf16.msra.mxu0 %v1208
        %1396 = vmatprep.subr.bf16.mxu0 %v1225
        %1397 = vmatpush1.bf16.msra.mxu0 %v1224
        %1398 = vmatprep.subr.bf16.mxu0 %v1241
        %1399 = vmatpush1.bf16.msra.mxu0 %v1240
        %1400 = vmatprep.subr.bf16.mxu0 0
        %1401 = vmatpush1.bf16.msra.mxu0 0
        %1402 = vmatprep.subr.bf16.mxu0 0
        %1403 = vmatpush1.bf16.msra.mxu0 0
        %1404 = vmatprep.subr.bf16.mxu0 0
        %1405 = vmatpush1.bf16.msra.mxu0 0
        %1406 = vmatprep.subr.bf16.mxu0 0
        %1407 = vmatpush1.bf16.msra.mxu0 0
        %1408 = vmatprep.subr.bf16.mxu0 0
        %1409 = vmatpush1.bf16.msra.mxu0 0
        %1410 = vmatprep.subr.bf16.mxu0 0
        %1411 = vmatpush1.bf16.msra.mxu0 0
        %1412 = vmatprep.subr.bf16.mxu0 0
        %1413 = vmatpush1.bf16.msra.mxu0 0
        %1414 = vmatprep.subr.bf16.mxu0 0
        %1415 = vmatpush1.bf16.msra.mxu0 0
        %1416 = vmatprep.mubr.bf16.mxu0 0
        %1417 = vmatmul.mubr.bf16.gmra.mrb[0].mxu0 %v531
        %v1418 = vpop.f32.mrb[0].mxu0
        %v1419 = vadd.f32 %v667, %v1418
        %v1420 = vpop.f32.mrb[0].mxu0
        %v1421 = vadd.f32 %v671, %v1420
        %v1422 = vpop.f32.mrb[0].mxu0
        %v1423 = vadd.f32 %v667, %v1422
        %v1424 = vpop.f32.mrb[0].mxu0
        %v1425 = vadd.f32 %v671, %v1424
        %1426 = vdwg.mxu0
        %1427 = vmatprep.subr.bf16.mxu0 %v1131
        %1428 = vmatpush1.bf16.msra.mxu0 %v1130
        %1429 = vmatprep.subr.bf16.mxu0 %v1147
        %1430 = vmatpush1.bf16.msra.mxu0 %v1146
        %1431 = vmatprep.subr.bf16.mxu0 %v1163
        %1432 = vmatpush1.bf16.msra.mxu0 %v1162
        %1433 = vmatprep.subr.bf16.mxu0 %v1179
        %1434 = vmatpush1.bf16.msra.mxu0 %v1178
        %1435 = vmatprep.subr.bf16.mxu0 %v1195
        %1436 = vmatpush1.bf16.msra.mxu0 %v1194
        %1437 = vmatprep.subr.bf16.mxu0 %v1211
        %1438 = vmatpush1.bf16.msra.mxu0 %v1210
        %1439 = vmatprep.subr.bf16.mxu0 %v1227
        %1440 = vmatpush1.bf16.msra.mxu0 %v1226
        %1441 = vmatprep.subr.bf16.mxu0 %v1243
        %1442 = vmatpush1.bf16.msra.mxu0 %v1242
        %1443 = vmatprep.subr.bf16.mxu0 0
        %1444 = vmatpush1.bf16.msra.mxu0 0
        %1445 = vmatprep.subr.bf16.mxu0 0
        %1446 = vmatpush1.bf16.msra.mxu0 0
        %1447 = vmatprep.subr.bf16.mxu0 0
        %1448 = vmatpush1.bf16.msra.mxu0 0
        %1449 = vmatprep.subr.bf16.mxu0 0
        %1450 = vmatpush1.bf16.msra.mxu0 0
        %1451 = vmatprep.subr.bf16.mxu0 0
        %1452 = vmatpush1.bf16.msra.mxu0 0
        %1453 = vmatprep.subr.bf16.mxu0 0
        %1454 = vmatpush1.bf16.msra.mxu0 0
        %1455 = vmatprep.subr.bf16.mxu0 0
        %1456 = vmatpush1.bf16.msra.mxu0 0
        %1457 = vmatprep.subr.bf16.mxu0 0
        %1458 = vmatpush1.bf16.msra.mxu0 0
        %1459 = vmatprep.mubr.bf16.mxu0 0
        %1460 = vmatmul.mubr.bf16.gmra.mrb[0].mxu0 %v531
        %v1461 = vpop.f32.mrb[0].mxu0
        %v1462 = vadd.f32 %v675, %v1461
        %v1463 = vpop.f32.mrb[0].mxu0
        %v1464 = vadd.f32 %v679, %v1463
        %v1465 = vpop.f32.mrb[0].mxu0
        %v1466 = vadd.f32 %v675, %v1465
        %v1467 = vpop.f32.mrb[0].mxu0
        %v1468 = vadd.f32 %v679, %v1467
        %1469 = vdwg.mxu0
        %1470 = vmatprep.subr.bf16.mxu0 %v1133
        %1471 = vmatpush1.bf16.msra.mxu0 %v1132
        %1472 = vmatprep.subr.bf16.mxu0 %v1149
        %1473 = vmatpush1.bf16.msra.mxu0 %v1148
        %1474 = vmatprep.subr.bf16.mxu0 %v1165
        %1475 = vmatpush1.bf16.msra.mxu0 %v1164
        %1476 = vmatprep.subr.bf16.mxu0 %v1181
        %1477 = vmatpush1.bf16.msra.mxu0 %v1180
        %1478 = vmatprep.subr.bf16.mxu0 %v1197
        %1479 = vmatpush1.bf16.msra.mxu0 %v1196
        %1480 = vmatprep.subr.bf16.mxu0 %v1213
        %1481 = vmatpush1.bf16.msra.mxu0 %v1212
        %1482 = vmatprep.subr.bf16.mxu0 %v1229
        %1483 = vmatpush1.bf16.msra.mxu0 %v1228
        %1484 = vmatprep.subr.bf16.mxu0 %v1245
        %1485 = vmatpush1.bf16.msra.mxu0 %v1244
        %1486 = vmatprep.subr.bf16.mxu0 0
        %1487 = vmatpush1.bf16.msra.mxu0 0
        %1488 = vmatprep.subr.bf16.mxu0 0
        %1489 = vmatpush1.bf16.msra.mxu0 0
        %1490 = vmatprep.subr.bf16.mxu0 0
        %1491 = vmatpush1.bf16.msra.mxu0 0
        %1492 = vmatprep.subr.bf16.mxu0 0
        %1493 = vmatpush1.bf16.msra.mxu0 0
        %1494 = vmatprep.subr.bf16.mxu0 0
        %1495 = vmatpush1.bf16.msra.mxu0 0
        %1496 = vmatprep.subr.bf16.mxu0 0
        %1497 = vmatpush1.bf16.msra.mxu0 0
        %1498 = vmatprep.subr.bf16.mxu0 0
        %1499 = vmatpush1.bf16.msra.mxu0 0
        %1500 = vmatprep.subr.bf16.mxu0 0
        %1501 = vmatpush1.bf16.msra.mxu0 0
        %1502 = vmatprep.mubr.bf16.mxu0 0
        %1503 = vmatmul.mubr.bf16.gmra.mrb[0].mxu0 %v531
        %v1504 = vpop.f32.mrb[0].mxu0
        %v1505 = vadd.f32 %v683, %v1504
        %v1506 = vpop.f32.mrb[0].mxu0
        %v1507 = vadd.f32 %v687, %v1506
        %v1508 = vpop.f32.mrb[0].mxu0
        %v1509 = vadd.f32 %v683, %v1508
        %v1510 = vpop.f32.mrb[0].mxu0
        %v1511 = vadd.f32 %v687, %v1510
        %1512 = vdwg.mxu0
        %1513 = vmatprep.subr.bf16.mxu0 %v1135
        %1514 = vmatpush1.bf16.msra.mxu0 %v1134
        %1515 = vmatprep.subr.bf16.mxu0 %v1151
        %1516 = vmatpush1.bf16.msra.mxu0 %v1150
        %1517 = vmatprep.subr.bf16.mxu0 %v1167
        %1518 = vmatpush1.bf16.msra.mxu0 %v1166
        %1519 = vmatprep.subr.bf16.mxu0 %v1183
        %1520 = vmatpush1.bf16.msra.mxu0 %v1182
        %1521 = vmatprep.subr.bf16.mxu0 %v1199
        %1522 = vmatpush1.bf16.msra.mxu0 %v1198
        %1523 = vmatprep.subr.bf16.mxu0 %v1215
        %1524 = vmatpush1.bf16.msra.mxu0 %v1214
        %1525 = vmatprep.subr.bf16.mxu0 %v1231
        %1526 = vmatpush1.bf16.msra.mxu0 %v1230
        %1527 = vmatprep.subr.bf16.mxu0 %v1247
        %1528 = vmatpush1.bf16.msra.mxu0 %v1246
        %1529 = vmatprep.subr.bf16.mxu0 0
        %1530 = vmatpush1.bf16.msra.mxu0 0
        %1531 = vmatprep.subr.bf16.mxu0 0
        %1532 = vmatpush1.bf16.msra.mxu0 0
        %1533 = vmatprep.subr.bf16.mxu0 0
        %1534 = vmatpush1.bf16.msra.mxu0 0
        %1535 = vmatprep.subr.bf16.mxu0 0
        %1536 = vmatpush1.bf16.msra.mxu0 0
        %1537 = vmatprep.subr.bf16.mxu0 0
        %1538 = vmatpush1.bf16.msra.mxu0 0
        %1539 = vmatprep.subr.bf16.mxu0 0
        %1540 = vmatpush1.bf16.msra.mxu0 0
        %1541 = vmatprep.subr.bf16.mxu0 0
        %1542 = vmatpush1.bf16.msra.mxu0 0
        %1543 = vmatprep.subr.bf16.mxu0 0
        %1544 = vmatpush1.bf16.msra.mxu0 0
        %1545 = vmatprep.mubr.bf16.mxu0 0
        %1546 = vmatmul.mubr.bf16.gmra.mrb[0].mxu0 %v531
        %v1547 = vpop.f32.mrb[0].mxu0
        %v1548 = vadd.f32 %v691, %v1547
        %v1549 = vpop.f32.mrb[0].mxu0
        %v1550 = vadd.f32 %v695, %v1549
        %v1551 = vpop.f32.mrb[0].mxu0
        %v1552 = vadd.f32 %v691, %v1551
        %v1553 = vpop.f32.mrb[0].mxu0
        %v1554 = vadd.f32 %v695, %v1553
        %1555 = vdwg.mxu0
        %1556 = vmatprep.subr.bf16.mxu0 %v1137
        %1557 = vmatpush1.bf16.msra.mxu0 %v1136
        %1558 = vmatprep.subr.bf16.mxu0 %v1153
        %1559 = vmatpush1.bf16.msra.mxu0 %v1152
        %1560 = vmatprep.subr.bf16.mxu0 %v1169
        %1561 = vmatpush1.bf16.msra.mxu0 %v1168
        %1562 = vmatprep.subr.bf16.mxu0 %v1185
        %1563 = vmatpush1.bf16.msra.mxu0 %v1184
        %1564 = vmatprep.subr.bf16.mxu0 %v1201
        %1565 = vmatpush1.bf16.msra.mxu0 %v1200
        %1566 = vmatprep.subr.bf16.mxu0 %v1217
        %1567 = vmatpush1.bf16.msra.mxu0 %v1216
        %1568 = vmatprep.subr.bf16.mxu0 %v1233
        %1569 = vmatpush1.bf16.msra.mxu0 %v1232
        %1570 = vmatprep.subr.bf16.mxu0 %v1249
        %1571 = vmatpush1.bf16.msra.mxu0 %v1248
        %1572 = vmatprep.subr.bf16.mxu0 0
        %1573 = vmatpush1.bf16.msra.mxu0 0
        %1574 = vmatprep.subr.bf16.mxu0 0
        %1575 = vmatpush1.bf16.msra.mxu0 0
        %1576 = vmatprep.subr.bf16.mxu0 0
        %1577 = vmatpush1.bf16.msra.mxu0 0
        %1578 = vmatprep.subr.bf16.mxu0 0
        %1579 = vmatpush1.bf16.msra.mxu0 0
        %1580 = vmatprep.subr.bf16.mxu0 0
        %1581 = vmatpush1.bf16.msra.mxu0 0
        %1582 = vmatprep.subr.bf16.mxu0 0
        %1583 = vmatpush1.bf16.msra.mxu0 0
        %1584 = vmatprep.subr.bf16.mxu0 0
        %1585 = vmatpush1.bf16.msra.mxu0 0
        %1586 = vmatprep.subr.bf16.mxu0 0
        %1587 = vmatpush1.bf16.msra.mxu0 0
        %1588 = vmatprep.mubr.bf16.mxu0 0
        %1589 = vmatmul.mubr.bf16.gmra.mrb[0].mxu0 %v531
        %v1590 = vpop.f32.mrb[0].mxu0
        %v1591 = vadd.f32 %v699, %v1590
        %v1592 = vpop.f32.mrb[0].mxu0
        %v1593 = vadd.f32 %v703, %v1592
        %v1594 = vpop.f32.mrb[0].mxu0
        %v1595 = vadd.f32 %v699, %v1594
        %v1596 = vpop.f32.mrb[0].mxu0
        %v1597 = vadd.f32 %v703, %v1596
        %1598 = vdwg.mxu0
        %1599 = vmatprep.subr.bf16.mxu0 %v1139
        %1600 = vmatpush1.bf16.msra.mxu0 %v1138
        %1601 = vmatprep.subr.bf16.mxu0 %v1155
        %1602 = vmatpush1.bf16.msra.mxu0 %v1154
        %1603 = vmatprep.subr.bf16.mxu0 %v1171
        %1604 = vmatpush1.bf16.msra.mxu0 %v1170
        %1605 = vmatprep.subr.bf16.mxu0 %v1187
        %1606 = vmatpush1.bf16.msra.mxu0 %v1186
        %1607 = vmatprep.subr.bf16.mxu0 %v1203
        %1608 = vmatpush1.bf16.msra.mxu0 %v1202
        %1609 = vmatprep.subr.bf16.mxu0 %v1219
        %1610 = vmatpush1.bf16.msra.mxu0 %v1218
        %1611 = vmatprep.subr.bf16.mxu0 %v1235
        %1612 = vmatpush1.bf16.msra.mxu0 %v1234
        %1613 = vmatprep.subr.bf16.mxu0 %v1251
        %1614 = vmatpush1.bf16.msra.mxu0 %v1250
        %1615 = vmatprep.subr.bf16.mxu0 0
        %1616 = vmatpush1.bf16.msra.mxu0 0
        %1617 = vmatprep.subr.bf16.mxu0 0
        %1618 = vmatpush1.bf16.msra.mxu0 0
        %1619 = vmatprep.subr.bf16.mxu0 0
        %1620 = vmatpush1.bf16.msra.mxu0 0
        %1621 = vmatprep.subr.bf16.mxu0 0
        %1622 = vmatpush1.bf16.msra.mxu0 0
        %1623 = vmatprep.subr.bf16.mxu0 0
        %1624 = vmatpush1.bf16.msra.mxu0 0
        %1625 = vmatprep.subr.bf16.mxu0 0
        %1626 = vmatpush1.bf16.msra.mxu0 0
        %1627 = vmatprep.subr.bf16.mxu0 0
        %1628 = vmatpush1.bf16.msra.mxu0 0
        %1629 = vmatprep.subr.bf16.mxu0 0
        %1630 = vmatpush1.bf16.msra.mxu0 0
        %1631 = vmatprep.mubr.bf16.mxu0 0
        %1632 = vmatmul.mubr.bf16.gmra.mrb[0].mxu0 %v531
        %v1633 = vpop.f32.mrb[0].mxu0
        %v1634 = vadd.f32 %v707, %v1633
        %v1635 = vpop.f32.mrb[0].mxu0
        %v1636 = vadd.f32 %v711, %v1635
        %v1637 = vpop.f32.mrb[0].mxu0
        %v1638 = vadd.f32 %v707, %v1637
        %v1639 = vpop.f32.mrb[0].mxu0
        %v1640 = vadd.f32 %v711, %v1639
        %1641 = vdwg.mxu0
        %1642 = vmatprep.subr.bf16.mxu0 %v1141
        %1643 = vmatpush1.bf16.msra.mxu0 %v1140
        %1644 = vmatprep.subr.bf16.mxu0 %v1157
        %1645 = vmatpush1.bf16.msra.mxu0 %v1156
        %1646 = vmatprep.subr.bf16.mxu0 %v1173
        %1647 = vmatpush1.bf16.msra.mxu0 %v1172
        %1648 = vmatprep.subr.bf16.mxu0 %v1189
        %1649 = vmatpush1.bf16.msra.mxu0 %v1188
        %1650 = vmatprep.subr.bf16.mxu0 %v1205
        %1651 = vmatpush1.bf16.msra.mxu0 %v1204
        %1652 = vmatprep.subr.bf16.mxu0 %v1221
        %1653 = vmatpush1.bf16.msra.mxu0 %v1220
        %1654 = vmatprep.subr.bf16.mxu0 %v1237
        %1655 = vmatpush1.bf16.msra.mxu0 %v1236
        %1656 = vmatprep.subr.bf16.mxu0 %v1253
        %1657 = vmatpush1.bf16.msra.mxu0 %v1252
        %1658 = vmatprep.subr.bf16.mxu0 0
        %1659 = vmatpush1.bf16.msra.mxu0 0
        %1660 = vmatprep.subr.bf16.mxu0 0
        %1661 = vmatpush1.bf16.msra.mxu0 0
        %1662 = vmatprep.subr.bf16.mxu0 0
        %1663 = vmatpush1.bf16.msra.mxu0 0
        %1664 = vmatprep.subr.bf16.mxu0 0
        %1665 = vmatpush1.bf16.msra.mxu0 0
        %1666 = vmatprep.subr.bf16.mxu0 0
        %1667 = vmatpush1.bf16.msra.mxu0 0
        %1668 = vmatprep.subr.bf16.mxu0 0
        %1669 = vmatpush1.bf16.msra.mxu0 0
        %1670 = vmatprep.subr.bf16.mxu0 0
        %1671 = vmatpush1.bf16.msra.mxu0 0
        %1672 = vmatprep.subr.bf16.mxu0 0
        %1673 = vmatpush1.bf16.msra.mxu0 0
        %1674 = vmatprep.mubr.bf16.mxu0 0
        %1675 = vmatmul.mubr.bf16.gmra.mrb[0].mxu0 %v531
        %v1676 = vpop.f32.mrb[0].mxu0
        %v1677 = vadd.f32 %v715, %v1676
        %v1678 = vpop.f32.mrb[0].mxu0
        %v1679 = vadd.f32 %v719, %v1678
        %v1680 = vpop.f32.mrb[0].mxu0
        %v1681 = vadd.f32 %v715, %v1680
        %v1682 = vpop.f32.mrb[0].mxu0
        %v1683 = vadd.f32 %v719, %v1682
        %1684 = vdwg.mxu0
        %1685 = vmatprep.subr.bf16.mxu0 %v1143
        %1686 = vmatpush1.bf16.msra.mxu0 %v1142
        %1687 = vmatprep.subr.bf16.mxu0 %v1159
        %1688 = vmatpush1.bf16.msra.mxu0 %v1158
        %1689 = vmatprep.subr.bf16.mxu0 %v1175
        %1690 = vmatpush1.bf16.msra.mxu0 %v1174
        %1691 = vmatprep.subr.bf16.mxu0 %v1191
        %1692 = vmatpush1.bf16.msra.mxu0 %v1190
        %1693 = vmatprep.subr.bf16.mxu0 %v1207
        %1694 = vmatpush1.bf16.msra.mxu0 %v1206
        %1695 = vmatprep.subr.bf16.mxu0 %v1223
        %1696 = vmatpush1.bf16.msra.mxu0 %v1222
        %1697 = vmatprep.subr.bf16.mxu0 %v1239
        %1698 = vmatpush1.bf16.msra.mxu0 %v1238
        %1699 = vmatprep.subr.bf16.mxu0 %v1255
        %1700 = vmatpush1.bf16.msra.mxu0 %v1254
        %1701 = vmatprep.subr.bf16.mxu0 0
        %1702 = vmatpush1.bf16.msra.mxu0 0
        %1703 = vmatprep.subr.bf16.mxu0 0
        %1704 = vmatpush1.bf16.msra.mxu0 0
        %1705 = vmatprep.subr.bf16.mxu0 0
        %1706 = vmatpush1.bf16.msra.mxu0 0
        %1707 = vmatprep.subr.bf16.mxu0 0
        %1708 = vmatpush1.bf16.msra.mxu0 0
        %1709 = vmatprep.subr.bf16.mxu0 0
        %1710 = vmatpush1.bf16.msra.mxu0 0
        %1711 = vmatprep.subr.bf16.mxu0 0
        %1712 = vmatpush1.bf16.msra.mxu0 0
        %1713 = vmatprep.subr.bf16.mxu0 0
        %1714 = vmatpush1.bf16.msra.mxu0 0
        %1715 = vmatprep.subr.bf16.mxu0 0
        %1716 = vmatpush1.bf16.msra.mxu0 0
        %1717 = vmatprep.mubr.bf16.mxu0 0
        %1718 = vmatmul.mubr.bf16.gmra.mrb[0].mxu0 %v531
        %v1719 = vpop.f32.mrb[0].mxu0
        %v1720 = vadd.f32 %v723, %v1719
        %v1721 = vpop.f32.mrb[0].mxu0
        %v1722 = vadd.f32 %v727, %v1721
        %v1723 = vpop.f32.mrb[0].mxu0
        %v1724 = vadd.f32 %v723, %v1723
        %v1725 = vpop.f32.mrb[0].mxu0
        %v1726 = vadd.f32 %v727, %v1725
        %1727 = vdwg.mxu0
        %1728 = vst [vmem:[%s428] sm:$0xff] %v1419
        %1729 = vst [vmem:[%s428 + $0x8] sm:$0xff] %v1421
        %1730 = vst [vmem:[%s428 + $0x10] sm:$0xff] %v1462
        %1731 = vst [vmem:[%s428 + $0x18] sm:$0xff] %v1464
        %1732 = vst [vmem:[%s428 + $0x20] sm:$0xff] %v1505
        %1733 = vst [vmem:[%s428 + $0x28] sm:$0xff] %v1507
        %1734 = vst [vmem:[%s428 + $0x30] sm:$0xff] %v1548
        %1735 = vst [vmem:[%s428 + $0x38] sm:$0xff] %v1550
        %1736 = vst [vmem:[%s428 + $0x40] sm:$0xff] %v1591
        %1737 = vst [vmem:[%s428 + $0x48] sm:$0xff] %v1593
        %1738 = vst [vmem:[%s428 + $0x50] sm:$0xff] %v1634
        %1739 = vst [vmem:[%s428 + $0x58] sm:$0xff] %v1636
        %1740 = vst [vmem:[%s428 + $0x60] sm:$0xff] %v1677
        %1741 = vst [vmem:[%s428 + $0x68] sm:$0xff] %v1679
        %1742 = vst [vmem:[%s428 + $0x70] sm:$0xff] %v1720
        %1743 = vst [vmem:[%s428 + $0x78] sm:$0xff] %v1722
        %1744 = vst [vmem:[%s428 + $0x80] sm:$0xff] %v1423
        %1745 = vst [vmem:[%s428 + $0x88] sm:$0xff] %v1425
        %1746 = vst [vmem:[%s428 + $0x90] sm:$0xff] %v1466
        %1747 = vst [vmem:[%s428 + $0x98] sm:$0xff] %v1468
        %1748 = vst [vmem:[%s428 + $0xa0] sm:$0xff] %v1509
        %1749 = vst [vmem:[%s428 + $0xa8] sm:$0xff] %v1511
        %1750 = vst [vmem:[%s428 + $0xb0] sm:$0xff] %v1552
        %1751 = vst [vmem:[%s428 + $0xb8] sm:$0xff] %v1554
        %1752 = vst [vmem:[%s428 + $0xc0] sm:$0xff] %v1595
        %1753 = vst [vmem:[%s428 + $0xc8] sm:$0xff] %v1597
        %1754 = vst [vmem:[%s428 + $0xd0] sm:$0xff] %v1638
        %1755 = vst [vmem:[%s428 + $0xd8] sm:$0xff] %v1640
        %1756 = vst [vmem:[%s428 + $0xe0] sm:$0xff] %v1681
        %1757 = vst [vmem:[%s428 + $0xe8] sm:$0xff] %v1683
        %1758 = vst [vmem:[%s428 + $0xf0] sm:$0xff] %v1724
        %1759 = vst [vmem:[%s428 + $0xf8] sm:$0xff] %v1726
        %p1760 = scmp.eq.s32.totalorder %s34, 1
        // Predicated region
        $region73: #{tpu_custom_call.1} parent=47 // pred_check
          %p1761 = pneg %p1760
        $region74: #{tpu_custom_call.1} parent=47 // pred_check_branch
          %1763 = sbr.rel (%p1761) target = $region76
        $region75: #{tpu_custom_call.1} parent=47 // pred_region
          %v1764 = vld [vmem:[#allocation8] sm:$0xf]
          %v1765 = vld [vmem:[#allocation8 + $0x4] sm:$0xf]
          %v1766 = vld [vmem:[#allocation8 + $0x8] sm:$0xf]
          %v1767 = vld [vmem:[#allocation8 + $0xc] sm:$0xf]
          %v1768 = vld [vmem:[#allocation8 + $0x10] sm:$0xf]
          %v1769 = vld [vmem:[#allocation8 + $0x14] sm:$0xf]
          %v1770 = vld [vmem:[#allocation8 + $0x18] sm:$0xf]
          %v1771 = vld [vmem:[#allocation8 + $0x1c] sm:$0xf]
          %v1772 = vld [vmem:[#allocation8 + $0x20] sm:$0xf]
          %v1773 = vld [vmem:[#allocation8 + $0x24] sm:$0xf]
          %v1774 = vld [vmem:[#allocation8 + $0x28] sm:$0xf]
          %v1775 = vld [vmem:[#allocation8 + $0x2c] sm:$0xf]
          %v1776 = vld [vmem:[#allocation8 + $0x30] sm:$0xf]
          %v1777 = vld [vmem:[#allocation8 + $0x34] sm:$0xf]
          %v1778 = vld [vmem:[#allocation8 + $0x38] sm:$0xf]
          %v1779 = vld [vmem:[#allocation8 + $0x3c] sm:$0xf]
          %v1780 = vld [vmem:[%s4] sm:$0x1]
          %v1782 = vlaneseq
          %v1783 = vshrl.u32 %v1782, 7
          %v1784 = vsub.s32 0, %v1783
          %v1785 = vrot.slane %v1780, %v1784
          %v1803 = vunpack.c.l.b16 %v1764
          %v1804 = vunpack.c.l.b16 %v1765
          %v1805 = vunpack.c.l.b16 %v1766
          %v1806 = vunpack.c.l.b16 %v1767
          %v1807 = vunpack.c.l.b16 %v1768
          %v1808 = vunpack.c.l.b16 %v1769
          %v1809 = vunpack.c.l.b16 %v1770
          %v1810 = vunpack.c.l.b16 %v1771
          %v1811 = vunpack.c.l.b16 %v1772
          %v1812 = vunpack.c.l.b16 %v1773
          %v1813 = vunpack.c.l.b16 %v1774
          %v1814 = vunpack.c.l.b16 %v1775
          %v1815 = vunpack.c.l.b16 %v1776
          %v1816 = vunpack.c.l.b16 %v1777
          %v1817 = vunpack.c.l.b16 %v1778
          %v1818 = vunpack.c.l.b16 %v1779
          %v1819 = vpack.c.b16 %v1804, %v1803
          %v1820 = vpack.c.b16 %v1806, %v1805
          %v1821 = vpack.c.b16 %v1808, %v1807
          %v1822 = vpack.c.b16 %v1810, %v1809
          %v1823 = vpack.c.b16 %v1812, %v1811
          %v1824 = vpack.c.b16 %v1814, %v1813
          %v1825 = vpack.c.b16 %v1816, %v1815
          %v1826 = vpack.c.b16 %v1818, %v1817
          %1835 = vmatprep.subr.bf16.mxu0 0
          %1836 = vmatpush1.bf16.msra.mxu0 %v1819
          %1837 = vmatprep.subr.bf16.mxu0 0
          %1838 = vmatpush1.bf16.msra.mxu0 %v1820
          %1839 = vmatprep.subr.bf16.mxu0 0
          %1840 = vmatpush1.bf16.msra.mxu0 %v1821
          %1841 = vmatprep.subr.bf16.mxu0 0
          %1842 = vmatpush1.bf16.msra.mxu0 %v1822
          %1843 = vmatprep.subr.bf16.mxu0 0
          %1844 = vmatpush1.bf16.msra.mxu0 %v1823
          %1845 = vmatprep.subr.bf16.mxu0 0
          %1846 = vmatpush1.bf16.msra.mxu0 %v1824
          %1847 = vmatprep.subr.bf16.mxu0 0
          %1848 = vmatpush1.bf16.msra.mxu0 %v1825
          %1849 = vmatprep.subr.bf16.mxu0 0
          %1850 = vmatpush1.bf16.msra.mxu0 %v1826
          %1851 = vmatprep.subr.bf16.mxu0 0
          %1852 = vmatpush1.bf16.msra.mxu0 0
          %1853 = vmatprep.subr.bf16.mxu0 0
          %1854 = vmatpush1.bf16.msra.mxu0 0
          %1855 = vmatprep.subr.bf16.mxu0 0
          %1856 = vmatpush1.bf16.msra.mxu0 0
          %1857 = vmatprep.subr.bf16.mxu0 0
          %1858 = vmatpush1.bf16.msra.mxu0 0
          %1859 = vmatprep.subr.bf16.mxu0 0
          %1860 = vmatpush1.bf16.msra.mxu0 0
          %1861 = vmatprep.subr.bf16.mxu0 0
          %1862 = vmatpush1.bf16.msra.mxu0 0
          %1863 = vmatprep.subr.bf16.mxu0 0
          %1864 = vmatpush1.bf16.msra.mxu0 0
          %1865 = vmatprep.subr.bf16.mxu0 0
          %1866 = vmatpush1.bf16.msra.mxu0 0
          %1867 = vmatprep.mubr.bf16.mxu0 0
          %1868 = vmatmul.mubr.bf16.gmra.mrb[0].mxu0 %v531
          %v1869 = vpop.f32.mrb[0].mxu0
          %v1870 = vadd.f32 %v1785, %v1869
          %v1871 = vpop.f32.mrb[0].mxu0
          %v1872 = vpop.f32.mrb[0].mxu0
          %v1873 = vadd.f32 %v1785, %v1872
          %v1874 = vpop.f32.mrb[0].mxu0
          %1875 = vdwg.mxu0
          %1876 = vst [vmem:[#allocation12] sm:$0xff] %v1870
          %1877 = vst [vmem:[#allocation12 + $0x8] sm:$0xff] %v1873
        $region76: #{tpu_custom_call.1} parent=47 // pred_fallthru
          _
        %s1878 = sand.u32 %s239, 1
        %s1879 = scalar_lea.sflag [#allocation14], %s1878
        %s1880 = sand.u32 %s239, 1
        %s1881 = smul.addr %s1880, 256
        %s1882 = scalar_lea.vmem [#allocation13], %s1881
        // Predicated region
        $region77: #{tpu_custom_call.1} parent=47 // pred_check
          %p1883 = pneg %p221
        $region78: #{tpu_custom_call.1} parent=47 // pred_check_branch
          %1885 = sbr.rel (%p1883) target = $region80
        $region79: #{tpu_custom_call.1} parent=47 // pred_region
          %s1886 = smul.u32 2, %s33
          %s1888 = ssub.s32 256, 256
          %1889 = vsyncadd [#allocation5], %s1888
          %s1890 = smul.addr %s1886, 128
          %s1891 = scalar_lea.hbm %s7, %s1890
          %s1892 = sshll.u32 [#allocation12], 4
          %s1893 = int_to_ptr.vmem [resolvable:$true] %s1892
          %1898 = dma.vmem_to_hbm [thread:$0]  %s1893, 256, %s1891, [#allocation5], 128, 128, 8
        $region80: #{tpu_custom_call.1} parent=47 // pred_fallthru
          _
        // Predicated region
        $region81: #{tpu_custom_call.1} parent=47 // pred_check
          %p1899 = pneg %p249
        $region82: #{tpu_custom_call.1} parent=47 // pred_check_branch
          %1901 = sbr.rel (%p1899) target = $region84
        $region83: #{tpu_custom_call.1} parent=47 // pred_region
          %s1902 = smul.u32 2, %s33
          %s1903 = smul.u32 16, %s34
          %s1905 = ssub.s32 4096, 4096
          %1906 = vsyncadd %s1879, %s1905
          %s1907 = smul.addr %s1902, 32
          %s1908 = sadd.s32 %s1903, %s1907
          %s1909 = smul.addr %s1908, 128
          %s1910 = scalar_lea.hbm %s8, %s1909
          %s1911 = sshll.u32 %s1882, 4
          %s1912 = int_to_ptr.vmem [resolvable:$true] %s1911
          %1917 = dma.vmem_to_hbm [thread:$0]  %s1912, 4096, %s1910, %s1879, 2048, 4096, 128
        $region84: #{tpu_custom_call.1} parent=47 // pred_fallthru
          _
        // Predicated region
        $region85: #{tpu_custom_call.1} parent=47 // pred_check
          %p1918 = pneg %p221
        $region86: #{tpu_custom_call.1} parent=47 // pred_check_branch
          %1920 = sbr.rel (%p1918) target = $region88
        $region87: #{tpu_custom_call.1} parent=47 // pred_region
          %1921 = dma.done [#allocation5], 256
        $region88: #{tpu_custom_call.1} parent=47 // pred_fallthru
          _
      $region48: #{tpu_custom_call.1} parent=5 // pred_fallthru
        _
      %p1922 = scmp.le.s32.totalorder 2, %s24
      // Predicated region
      $region89: #{tpu_custom_call.1} parent=5 // pred_check
        %p1923 = pneg %p1922
      $region90: #{tpu_custom_call.1} parent=5 // pred_check_branch
        %1925 = sbr.rel (%p1923) target = $region92
      $region91: #{tpu_custom_call.1} parent=5 // pred_region
        %s1926 = ssub.s32 %s24, 2
        // Predicated region
        $region93: #{tpu_custom_call.1} parent=91 // pred_check
          %p1927 = pneg %p255
        $region94: #{tpu_custom_call.1} parent=91 // pred_check_branch
          %1929 = sbr.rel (%p1927) target = $region96
        $region95: #{tpu_custom_call.1} parent=91 // pred_region
          %s1930 = sand.u32 %s240, 1
          %s1931 = scalar_lea.sflag [#allocation14], %s1930
          %s1932 = sand.u32 %s240, 1
          %s1933 = smul.addr %s1932, 256
          %s1934 = scalar_lea.vmem [#allocation13], %s1933
          %1935 = dma.done %s1931, 4096
        $region96: #{tpu_custom_call.1} parent=91 // pred_fallthru
          _
      $region92: #{tpu_custom_call.1} parent=5 // pred_fallthru
        _
    $region6: #{tpu_custom_call.1} parent=1 // loop_footer
      %s28 = sadd.s32 1, %s24
    $region7: #{tpu_custom_call.1} parent=1 // loop_footer_branch
      %23 = sbr.rel target = $region3
    $region8: #{tpu_custom_call.1} parent=1 // loop_exit
      _
    %1936 = vsyncpa [#allocation4], 1
    %s1937 = scalar_lea.sflag [#allocation4], 1
    %1938 = vsyncpa %s1937, 1
    %1939 = vsyncpa [#allocation7], 1
    %1940 = vsyncpa [#allocation10], 1
    %s1941 = scalar_lea.sflag [#allocation10], 1
    %1942 = vsyncpa %s1941, 1
    %1943 = vsyncpa [#allocation5], 1
    %s1944 = scalar_lea.sflag [#allocation5], 1
    %1945 = vsyncpa %s1944, 1
    %1946 = vsyncpa [#allocation14], 1
    %s1947 = scalar_lea.sflag [#allocation14], 1
    %1948 = vsyncpa %s1947, 1

</llo_original>
